<compile_context>
chip_gen: v7x
topology: tpu7x:2x2x1
jax: 0.10.0
libtpu: 0.0.40
codegen_flags: <defaults>
</compile_context>

<pallas_src>
import numpy as np
import jax
import jax.numpy as jnp
from jax.experimental import pallas as pl
from jax.experimental.pallas import tpu as pltpu


# ---------------------------------------------------------------------------
# Fused Pallas kernel
# ---------------------------------------------------------------------------
def make_fused_cnn_kernel(B, H, W, C0, C1, C2, HID, NCLS):
    Hh, Wh = H // 2, W // 2
    half = Wh * C2            # lane offset of the odd-w pixel block in conv2 output

    def kernel(x_ref, t1_ref, b1_ref, t2_ref, b2_ref,
               wf1_ref, bf1_ref, wf2_ref, bf2_ref,
               o_ref, xpad1_ref, xpad2_ref, feats_ref):

        def conv3x3_relu(xpad_ref, act, t_ref, b_ref, cin, cout):
            # act: (B, H, W*cin) lane-dense activations.
            # Zero-pad along H inside VMEM scratch; the W padding and the kw
            # taps are already folded into the row-Toeplitz matrices t_ref[kh].
            xpad_ref[...] = jnp.zeros_like(xpad_ref)
            xpad_ref[:, 1:H + 1, :] = act
            acc = jnp.zeros((B * H, W * cout), jnp.float32)
            for kh in range(3):                               # 3 MXU matmuls
                s = xpad_ref[:, kh:kh + H, :].reshape(B * H, W * cin)
                acc = acc + jnp.dot(s, t_ref[kh],
                                    preferred_element_type=jnp.float32)
            return jnp.maximum(acc + b_ref[...], 0.0)         # (B*H, W*cout)

        a1 = conv3x3_relu(xpad1_ref, x_ref[...], t1_ref, b1_ref, C0, C1)
        a2 = conv3x3_relu(xpad2_ref, a1.reshape(B, H, W * C1),
                          t2_ref, b2_ref, C1, C2)

        # --- 2x2 max pool ---------------------------------------------------
        # W direction: conv2 columns are ordered (parity, wh, c), so this is a
        # single lane-halves maximum (no strided sublane slicing).
        ap = jnp.maximum(a2[:, :half], a2[:, half:])          # (B*H, Wh*C2)

        # H direction + flatten: pair rows (b, 2hh)/(b, 2hh+1) and lay the
        # pooled rows out along lanes in (hh, wh, c) order; fc1 weight rows
        # were pre-permuted to this order at prep time.
        for b in range(B):
            row = jnp.concatenate(
                [jnp.maximum(ap[b * H + 2 * hh: b * H + 2 * hh + 1, :],
                             ap[b * H + 2 * hh + 1: b * H + 2 * hh + 2, :])
                 for hh in range(Hh)], axis=-1)               # (1, Hh*Wh*C2)
            feats_ref[b:b + 1, :] = row

        # --- fused MLP: fc1 + relu + fc2 (all in VMEM / vregs) ---------------
        h1 = jnp.maximum(
            jnp.dot(feats_ref[...], wf1_ref[...],
                    preferred_element_type=jnp.float32) + bf1_ref[...], 0.0)
        logits = jnp.dot(h1, wf2_ref[...],
                         preferred_element_type=jnp.float32) + bf2_ref[...]
        o_ref[...] = logits.astype(o_ref.dtype)

    return kernel


def cnn_forward_pallas(x_nchw, prep):
    B, C0, H, W = x_nchw.shape
    assert C0 == prep["c0"]
    C1, C2 = prep["c1"], prep["c2"]
    HID, NCLS = prep["hid"], prep["ncls"]

    # NCHW -> lane-dense rows (B, H, W*C0); the only op outside the kernel.
    x_rows = jnp.transpose(x_nchw, (0, 2, 3, 1)).reshape(B, H, W * C0)

    kernel = make_fused_cnn_kernel(B, H, W, C0, C1, C2, HID, NCLS)
    # NOTE: when scaling B/H/W up, add a grid over the batch/row axis with
    # dimension_semantics=("parallel",) so both TensorCores on v7x are used,
    # and budget tiles against v7x's 64 MiB VMEM. At B=2 a single grid point
    # is fastest (dispatch + HBM traffic dominate, not compute).
    return pl.pallas_call(
        kernel,
        out_shape=jax.ShapeDtypeStruct((B, NCLS), jnp.float32),
        in_specs=[pl.BlockSpec(memory_space=pltpu.MemorySpace.VMEM)] * 9,
        out_specs=pl.BlockSpec(memory_space=pltpu.MemorySpace.VMEM),
        scratch_shapes=[
            pltpu.VMEM((B, H + 2, W * C0), jnp.float32),   # H-padded input rows
            pltpu.VMEM((B, H + 2, W * C1), jnp.float32),   # H-padded conv1 rows
            pltpu.VMEM((B, (H // 2) * (W // 2) * C2), jnp.float32),  # flat feats
        ],
    )(x_rows, prep["t1"], prep["b1_row"], prep["t2"], prep["b2_row"],
      prep["wf1"], prep["bf1"], prep["wf2"], prep["bf2"])


# ---------------------------------------------------------------------------
# Parameter construction (PyTorch-layout) and kernel-layout preparation
# ---------------------------------------------------------------------------
def init_params(key, in_channels, channels, n_features, hidden_dims, out_classes):
    params = {"conv": [], "fc": []}
    cin = in_channels
    for cout in channels:
        key, kw_, kb_ = jax.random.split(key, 3)
        scale = 1.0 / jnp.sqrt(cin * 9.0)
        w = jax.random.normal(kw_, (3, 3, cin, cout), jnp.float32) * scale  # HWIO
        b = jax.random.normal(kb_, (cout,), jnp.float32) * scale
        params["conv"].append((w, b))
        cin = cout
    dims = [n_features] + list(hidden_dims) + [out_classes]
    for din, dout in zip(dims[:-1], dims[1:]):
        key, kw_, kb_ = jax.random.split(key, 3)
        scale = 1.0 / jnp.sqrt(float(din))
        w = jax.random.normal(kw_, (din, dout), jnp.float32) * scale
        b = jax.random.normal(kb_, (dout,), jnp.float32) * scale
        params["fc"].append((w, b))
    return params


def prepare_kernel_params(params, H, W):
    """One-time weight layout transforms (done at init, off the hot path)."""
    (w1, b1), (w2, b2) = params["conv"]
    (wf1, bf1), (wf2, bf2) = params["fc"]
    C0, C1 = w1.shape[2], w1.shape[3]
    C2 = w2.shape[3]
    Hh, Wh = H // 2, W // 2
    HID, NCLS = wf1.shape[1], wf2.shape[1]
    assert wf1.shape[0] == C2 * Hh * Wh

    def row_toeplitz(w_hwio, col_slot):
        # T[kh, wi*Cin+ci, col_slot(w)*Cout+co] = w[kh, wi-w+1, ci, co]
        # (W-direction zero padding folded in by omitting out-of-range taps).
        w_np = np.asarray(w_hwio)
        KH, KW, Cin, Cout = w_np.shape
        T = np.zeros((KH, W * Cin, W * Cout), np.float32)
        for kh in range(KH):
            for w in range(W):
                for kw in range(KW):
                    wi = w + kw - 1
                    if 0 <= wi < W:
                        c0 = col_slot(w) * Cout
                        T[kh, wi * Cin:(wi + 1) * Cin, c0:c0 + Cout] = w_np[kh, kw]
        return jnp.asarray(T)

    t1 = row_toeplitz(w1, lambda w: w)                        # standard (w, c) cols
    # conv2 output columns ordered (parity, wh, c) -> W-pool is a lane-halves max
    t2 = row_toeplitz(w2, lambda w: (w % 2) * Wh + w // 2)

    b1_row = jnp.tile(b1, W).reshape(1, W * C1)
    b2_row = jnp.tile(b2, W).reshape(1, W * C2)

    # PyTorch flattens features in (c, hh, wh) order; the kernel produces
    # (hh, wh, c) -> permute fc1 rows accordingly (free, once at prep time).
    wf1_perm = (wf1.reshape(C2, Hh, Wh, HID)
                   .transpose(1, 2, 0, 3)
                   .reshape(Hh * Wh * C2, HID))

    return {
        "t1": t1, "b1_row": b1_row, "t2": t2, "b2_row": b2_row,
        "wf1": wf1_perm, "bf1": bf1.reshape(1, HID),
        "wf2": wf2, "bf2": bf2.reshape(1, NCLS),
        "c0": C0, "c1": C1, "c2": C2, "hid": HID, "ncls": NCLS,
    }


# ---------------------------------------------------------------------------
# Pure-JAX reference (mirrors the PyTorch module exactly)
# ---------------------------------------------------------------------------
def cnn_forward_ref(x_nchw, params, pool_every):
    x = jnp.transpose(x_nchw, (0, 2, 3, 1))                   # NCHW -> NHWC
    conv_counter = 0
    for (w, b) in params["conv"]:
        y = jax.lax.conv_general_dilated(
            x, w, window_strides=(1, 1), padding="SAME",
            dimension_numbers=("NHWC", "HWIO", "NHWC"))
        x = jnp.maximum(y + b, 0.0)
        conv_counter += 1
        if conv_counter == pool_every:
            conv_counter = 0
            x = jax.lax.reduce_window(
                x, -jnp.inf, jax.lax.max,
                window_dimensions=(1, 2, 2, 1), window_strides=(1, 2, 2, 1),
                padding="VALID")
    feats = jnp.transpose(x, (0, 3, 1, 2)).reshape(x.shape[0], -1)  # CHW flatten
    n_fc = len(params["fc"])
    for i, (w, b) in enumerate(params["fc"]):
        feats = feats @ w + b
        if i != n_fc - 1:
            feats = jnp.maximum(feats, 0.0)
    return feats


# ---------------------------------------------------------------------------
if __name__ == "__main__":
    in_size = (4, 16, 16)          # (C, H, W)
    channels = [8, 8]
    pool_every = 2
    hidden_dims = [32]
    out_classes = 10
    batch = 2

    C, H, W = in_size
    n_pools = len(channels) // pool_every
    n_features = channels[-1] * (H // (2 ** n_pools)) * (W // (2 ** n_pools))  # 512

    key = jax.random.PRNGKey(0)
    key, kx = jax.random.split(key)
    x = jax.random.normal(kx, (batch, C, H, W), jnp.float32)   # NCHW like PyTorch

    params = init_params(key, C, channels, n_features, hidden_dims, out_classes)
    prep = prepare_kernel_params(params, H, W)

    out = jax.block_until_ready(cnn_forward_pallas(x, prep))
    ref = jax.block_until_ready(cnn_forward_ref(x, params, pool_every))

    assert out.shape == (batch, out_classes)
    assert bool(jnp.all(jnp.isfinite(out)))
    assert bool(jnp.allclose(out, ref, rtol=2e-2, atol=2e-2)), "mismatch vs JAX reference"

    print("KERNEL_OK")
</pallas_src>

<mosaic_0001>
module attributes {stable_mosaic.version = 11 : i64} {
  func.func @kernel(%arg0: memref<2x16x64xf32, #tpu.memory_space<vmem>>, %arg1: memref<3x64x128xf32, #tpu.memory_space<vmem>>, %arg2: memref<1x128xf32, #tpu.memory_space<vmem>>, %arg3: memref<3x128x128xf32, #tpu.memory_space<vmem>>, %arg4: memref<1x128xf32, #tpu.memory_space<vmem>>, %arg5: memref<512x32xf32, #tpu.memory_space<vmem>>, %arg6: memref<1x32xf32, #tpu.memory_space<vmem>>, %arg7: memref<32x10xf32, #tpu.memory_space<vmem>>, %arg8: memref<1x10xf32, #tpu.memory_space<vmem>>, %arg9: memref<2x10xf32, #tpu.memory_space<vmem>>, %arg10: memref<2x18x64xf32, #tpu.memory_space<vmem>>, %arg11: memref<2x18x128xf32, #tpu.memory_space<vmem>>, %arg12: memref<2x512xf32, #tpu.memory_space<vmem>>) attributes {dimension_semantics = [], scalar_prefetch = 0 : i64, scratch_operands = 3 : i64, tpu.core_type = #tpu.core_type<tc>} {
    %c0 = arith.constant 0 : index
    %c0_0 = arith.constant 0 : index
    %c0_1 = arith.constant 0 : index
    %0 = vector.load %arg0[%c0, %c0_0, %c0_1] : memref<2x16x64xf32, #tpu.memory_space<vmem>>, vector<2x16x64xf32>
    %cst = arith.constant 0.000000e+00 : f32
    %1 = vector.broadcast %cst : f32 to vector<2x18x64xf32>
    %c0_2 = arith.constant 0 : index
    %c0_3 = arith.constant 0 : index
    %c0_4 = arith.constant 0 : index
    %2 = vector.load %arg10[%c0_2, %c0_3, %c0_4] : memref<2x18x64xf32, #tpu.memory_space<vmem>>, vector<2x18x64xf32>
    tpu.vector_store %arg10[%c0_2, %c0_3, %c0_4], %1 {strides = array<i32>} : memref<2x18x64xf32, #tpu.memory_space<vmem>>, vector<2x18x64xf32>,
    %c0_5 = arith.constant 0 : index
    %c1 = arith.constant 1 : index
    %c0_6 = arith.constant 0 : index
    %3 = vector.load %arg10[%c0_5, %c1, %c0_6] : memref<2x18x64xf32, #tpu.memory_space<vmem>>, vector<2x16x64xf32>
    tpu.vector_store %arg10[%c0_5, %c1, %c0_6], %0 {strides = array<i32>} : memref<2x18x64xf32, #tpu.memory_space<vmem>>, vector<2x16x64xf32>,
    %cst_7 = arith.constant 0.000000e+00 : f32
    %4 = vector.broadcast %cst_7 : f32 to vector<32x128xf32>
    %c0_8 = arith.constant 0 : index
    %c0_9 = arith.constant 0 : index
    %c0_10 = arith.constant 0 : index
    %5 = vector.load %arg10[%c0_8, %c0_9, %c0_10] : memref<2x18x64xf32, #tpu.memory_space<vmem>>, vector<2x16x64xf32>
    %6 = vector.shape_cast %5 : vector<2x16x64xf32> to vector<32x64xf32>
    %c0_11 = arith.constant 0 : index
    %c0_12 = arith.constant 0 : index
    %c0_13 = arith.constant 0 : index
    %7 = vector.load %arg1[%c0_11, %c0_12, %c0_13] : memref<3x64x128xf32, #tpu.memory_space<vmem>>, vector<1x64x128xf32>
    %8 = vector.shape_cast %7 : vector<1x64x128xf32> to vector<64x128xf32>
    %cst_14 = arith.constant dense<0.000000e+00> : vector<32x128xf32>
    %9 = tpu.matmul %6, %8, %cst_14 {dimension_numbers = #tpu.dot_dimension_numbers<[1], [0], [0], [1], [0, 0, 1, 1], [], []>} : vector<32x64xf32>, vector<64x128xf32>, vector<32x128xf32> -> vector<32x128xf32>
    %10 = arith.addf %4, %9 : vector<32x128xf32>
    %c0_15 = arith.constant 0 : index
    %c1_16 = arith.constant 1 : index
    %c0_17 = arith.constant 0 : index
    %11 = vector.load %arg10[%c0_15, %c1_16, %c0_17] : memref<2x18x64xf32, #tpu.memory_space<vmem>>, vector<2x16x64xf32>
    %12 = vector.shape_cast %11 : vector<2x16x64xf32> to vector<32x64xf32>
    %c1_18 = arith.constant 1 : index
    %c0_19 = arith.constant 0 : index
    %c0_20 = arith.constant 0 : index
    %13 = vector.load %arg1[%c1_18, %c0_19, %c0_20] : memref<3x64x128xf32, #tpu.memory_space<vmem>>, vector<1x64x128xf32>
    %14 = vector.shape_cast %13 : vector<1x64x128xf32> to vector<64x128xf32>
    %cst_21 = arith.constant dense<0.000000e+00> : vector<32x128xf32>
    %15 = tpu.matmul %12, %14, %cst_21 {dimension_numbers = #tpu.dot_dimension_numbers<[1], [0], [0], [1], [0, 0, 1, 1], [], []>} : vector<32x64xf32>, vector<64x128xf32>, vector<32x128xf32> -> vector<32x128xf32>
    %16 = arith.addf %10, %15 : vector<32x128xf32>
    %c0_22 = arith.constant 0 : index
    %c2 = arith.constant 2 : index
    %c0_23 = arith.constant 0 : index
    %17 = vector.load %arg10[%c0_22, %c2, %c0_23] : memref<2x18x64xf32, #tpu.memory_space<vmem>>, vector<2x16x64xf32>
    %18 = vector.shape_cast %17 : vector<2x16x64xf32> to vector<32x64xf32>
    %c2_24 = arith.constant 2 : index
    %c0_25 = arith.constant 0 : index
    %c0_26 = arith.constant 0 : index
    %19 = vector.load %arg1[%c2_24, %c0_25, %c0_26] : memref<3x64x128xf32, #tpu.memory_space<vmem>>, vector<1x64x128xf32>
    %20 = vector.shape_cast %19 : vector<1x64x128xf32> to vector<64x128xf32>
    %cst_27 = arith.constant dense<0.000000e+00> : vector<32x128xf32>
    %21 = tpu.matmul %18, %20, %cst_27 {dimension_numbers = #tpu.dot_dimension_numbers<[1], [0], [0], [1], [0, 0, 1, 1], [], []>} : vector<32x64xf32>, vector<64x128xf32>, vector<32x128xf32> -> vector<32x128xf32>
    %22 = arith.addf %16, %21 : vector<32x128xf32>
    %c0_28 = arith.constant 0 : index
    %c0_29 = arith.constant 0 : index
    %23 = vector.load %arg2[%c0_28, %c0_29] : memref<1x128xf32, #tpu.memory_space<vmem>>, vector<1x128xf32>
    %24 = vector.broadcast %23 : vector<1x128xf32> to vector<32x128xf32>
    %25 = arith.addf %22, %24 : vector<32x128xf32>
    %cst_30 = arith.constant 0.000000e+00 : f32
    %26 = vector.broadcast %cst_30 : f32 to vector<32x128xf32>
    %27 = arith.maximumf %25, %26 : vector<32x128xf32>
    %28 = vector.shape_cast %27 : vector<32x128xf32> to vector<2x16x128xf32>
    %cst_31 = arith.constant 0.000000e+00 : f32
    %29 = vector.broadcast %cst_31 : f32 to vector<2x18x128xf32>
    %c0_32 = arith.constant 0 : index
    %c0_33 = arith.constant 0 : index
    %c0_34 = arith.constant 0 : index
    %30 = vector.load %arg11[%c0_32, %c0_33, %c0_34] : memref<2x18x128xf32, #tpu.memory_space<vmem>>, vector<2x18x128xf32>
    tpu.vector_store %arg11[%c0_32, %c0_33, %c0_34], %29 {strides = array<i32>} : memref<2x18x128xf32, #tpu.memory_space<vmem>>, vector<2x18x128xf32>,
    %c0_35 = arith.constant 0 : index
    %c1_36 = arith.constant 1 : index
    %c0_37 = arith.constant 0 : index
    %31 = vector.load %arg11[%c0_35, %c1_36, %c0_37] : memref<2x18x128xf32, #tpu.memory_space<vmem>>, vector<2x16x128xf32>
    tpu.vector_store %arg11[%c0_35, %c1_36, %c0_37], %28 {strides = array<i32>} : memref<2x18x128xf32, #tpu.memory_space<vmem>>, vector<2x16x128xf32>,
    %cst_38 = arith.constant 0.000000e+00 : f32
    %32 = vector.broadcast %cst_38 : f32 to vector<32x128xf32>
    %c0_39 = arith.constant 0 : index
    %c0_40 = arith.constant 0 : index
    %c0_41 = arith.constant 0 : index
    %33 = vector.load %arg11[%c0_39, %c0_40, %c0_41] : memref<2x18x128xf32, #tpu.memory_space<vmem>>, vector<2x16x128xf32>
    %34 = vector.shape_cast %33 : vector<2x16x128xf32> to vector<32x128xf32>
    %c0_42 = arith.constant 0 : index
    %c0_43 = arith.constant 0 : index
    %c0_44 = arith.constant 0 : index
    %35 = vector.load %arg3[%c0_42, %c0_43, %c0_44] : memref<3x128x128xf32, #tpu.memory_space<vmem>>, vector<1x128x128xf32>
    %36 = vector.shape_cast %35 : vector<1x128x128xf32> to vector<128x128xf32>
    %cst_45 = arith.constant dense<0.000000e+00> : vector<32x128xf32>
    %37 = tpu.matmul %34, %36, %cst_45 {dimension_numbers = #tpu.dot_dimension_numbers<[1], [0], [0], [1], [0, 0, 1, 1], [], []>} : vector<32x128xf32>, vector<128x128xf32>, vector<32x128xf32> -> vector<32x128xf32>
    %38 = arith.addf %32, %37 : vector<32x128xf32>
    %c0_46 = arith.constant 0 : index
    %c1_47 = arith.constant 1 : index
    %c0_48 = arith.constant 0 : index
    %39 = vector.load %arg11[%c0_46, %c1_47, %c0_48] : memref<2x18x128xf32, #tpu.memory_space<vmem>>, vector<2x16x128xf32>
    %40 = vector.shape_cast %39 : vector<2x16x128xf32> to vector<32x128xf32>
    %c1_49 = arith.constant 1 : index
    %c0_50 = arith.constant 0 : index
    %c0_51 = arith.constant 0 : index
    %41 = vector.load %arg3[%c1_49, %c0_50, %c0_51] : memref<3x128x128xf32, #tpu.memory_space<vmem>>, vector<1x128x128xf32>
    %42 = vector.shape_cast %41 : vector<1x128x128xf32> to vector<128x128xf32>
    %cst_52 = arith.constant dense<0.000000e+00> : vector<32x128xf32>
    %43 = tpu.matmul %40, %42, %cst_52 {dimension_numbers = #tpu.dot_dimension_numbers<[1], [0], [0], [1], [0, 0, 1, 1], [], []>} : vector<32x128xf32>, vector<128x128xf32>, vector<32x128xf32> -> vector<32x128xf32>
    %44 = arith.addf %38, %43 : vector<32x128xf32>
    %c0_53 = arith.constant 0 : index
    %c2_54 = arith.constant 2 : index
    %c0_55 = arith.constant 0 : index
    %45 = vector.load %arg11[%c0_53, %c2_54, %c0_55] : memref<2x18x128xf32, #tpu.memory_space<vmem>>, vector<2x16x128xf32>
    %46 = vector.shape_cast %45 : vector<2x16x128xf32> to vector<32x128xf32>
    %c2_56 = arith.constant 2 : index
    %c0_57 = arith.constant 0 : index
    %c0_58 = arith.constant 0 : index
    %47 = vector.load %arg3[%c2_56, %c0_57, %c0_58] : memref<3x128x128xf32, #tpu.memory_space<vmem>>, vector<1x128x128xf32>
    %48 = vector.shape_cast %47 : vector<1x128x128xf32> to vector<128x128xf32>
    %cst_59 = arith.constant dense<0.000000e+00> : vector<32x128xf32>
    %49 = tpu.matmul %46, %48, %cst_59 {dimension_numbers = #tpu.dot_dimension_numbers<[1], [0], [0], [1], [0, 0, 1, 1], [], []>} : vector<32x128xf32>, vector<128x128xf32>, vector<32x128xf32> -> vector<32x128xf32>
    %50 = arith.addf %44, %49 : vector<32x128xf32>
    %c0_60 = arith.constant 0 : index
    %c0_61 = arith.constant 0 : index
    %51 = vector.load %arg4[%c0_60, %c0_61] : memref<1x128xf32, #tpu.memory_space<vmem>>, vector<1x128xf32>
    %52 = vector.broadcast %51 : vector<1x128xf32> to vector<32x128xf32>
    %53 = arith.addf %50, %52 : vector<32x128xf32>
    %cst_62 = arith.constant 0.000000e+00 : f32
    %54 = vector.broadcast %cst_62 : f32 to vector<32x128xf32>
    %55 = arith.maximumf %53, %54 : vector<32x128xf32>
    %56 = vector.extract_strided_slice %55 {offsets = [0, 0], sizes = [32, 64], strides = [1, 1]} : vector<32x128xf32> to vector<32x64xf32>
    %57 = vector.extract_strided_slice %55 {offsets = [0, 64], sizes = [32, 64], strides = [1, 1]} : vector<32x128xf32> to vector<32x64xf32>
    %58 = arith.maximumf %56, %57 : vector<32x64xf32>
    %59 = vector.extract_strided_slice %58 {offsets = [0, 0], sizes = [1, 64], strides = [1, 1]} : vector<32x64xf32> to vector<1x64xf32>
    %60 = vector.extract_strided_slice %58 {offsets = [1, 0], sizes = [1, 64], strides = [1, 1]} : vector<32x64xf32> to vector<1x64xf32>
    %61 = arith.maximumf %59, %60 : vector<1x64xf32>
    %62 = vector.extract_strided_slice %58 {offsets = [2, 0], sizes = [1, 64], strides = [1, 1]} : vector<32x64xf32> to vector<1x64xf32>
    %63 = vector.extract_strided_slice %58 {offsets = [3, 0], sizes = [1, 64], strides = [1, 1]} : vector<32x64xf32> to vector<1x64xf32>
    %64 = arith.maximumf %62, %63 : vector<1x64xf32>
    %65 = vector.extract_strided_slice %58 {offsets = [4, 0], sizes = [1, 64], strides = [1, 1]} : vector<32x64xf32> to vector<1x64xf32>
    %66 = vector.extract_strided_slice %58 {offsets = [5, 0], sizes = [1, 64], strides = [1, 1]} : vector<32x64xf32> to vector<1x64xf32>
    %67 = arith.maximumf %65, %66 : vector<1x64xf32>
    %68 = vector.extract_strided_slice %58 {offsets = [6, 0], sizes = [1, 64], strides = [1, 1]} : vector<32x64xf32> to vector<1x64xf32>
    %69 = vector.extract_strided_slice %58 {offsets = [7, 0], sizes = [1, 64], strides = [1, 1]} : vector<32x64xf32> to vector<1x64xf32>
    %70 = arith.maximumf %68, %69 : vector<1x64xf32>
    %71 = vector.extract_strided_slice %58 {offsets = [8, 0], sizes = [1, 64], strides = [1, 1]} : vector<32x64xf32> to vector<1x64xf32>
    %72 = vector.extract_strided_slice %58 {offsets = [9, 0], sizes = [1, 64], strides = [1, 1]} : vector<32x64xf32> to vector<1x64xf32>
    %73 = arith.maximumf %71, %72 : vector<1x64xf32>
    %74 = vector.extract_strided_slice %58 {offsets = [10, 0], sizes = [1, 64], strides = [1, 1]} : vector<32x64xf32> to vector<1x64xf32>
    %75 = vector.extract_strided_slice %58 {offsets = [11, 0], sizes = [1, 64], strides = [1, 1]} : vector<32x64xf32> to vector<1x64xf32>
    %76 = arith.maximumf %74, %75 : vector<1x64xf32>
    %77 = vector.extract_strided_slice %58 {offsets = [12, 0], sizes = [1, 64], strides = [1, 1]} : vector<32x64xf32> to vector<1x64xf32>
    %78 = vector.extract_strided_slice %58 {offsets = [13, 0], sizes = [1, 64], strides = [1, 1]} : vector<32x64xf32> to vector<1x64xf32>
    %79 = arith.maximumf %77, %78 : vector<1x64xf32>
    %80 = vector.extract_strided_slice %58 {offsets = [14, 0], sizes = [1, 64], strides = [1, 1]} : vector<32x64xf32> to vector<1x64xf32>
    %81 = vector.extract_strided_slice %58 {offsets = [15, 0], sizes = [1, 64], strides = [1, 1]} : vector<32x64xf32> to vector<1x64xf32>
    %82 = arith.maximumf %80, %81 : vector<1x64xf32>
    %83 = tpu.concatenate %61, %64, %67, %70, %73, %76, %79, %82 in 1 : vector<1x64xf32>, vector<1x64xf32>, vector<1x64xf32>, vector<1x64xf32>, vector<1x64xf32>, vector<1x64xf32>, vector<1x64xf32>, vector<1x64xf32> -> vector<1x512xf32>
    %c0_63 = arith.constant 0 : index
    %c0_64 = arith.constant 0 : index
    %84 = vector.load %arg12[%c0_63, %c0_64] : memref<2x512xf32, #tpu.memory_space<vmem>>, vector<1x512xf32>
    tpu.vector_store %arg12[%c0_63, %c0_64], %83 {strides = array<i32>} : memref<2x512xf32, #tpu.memory_space<vmem>>, vector<1x512xf32>,
    %85 = vector.extract_strided_slice %58 {offsets = [16, 0], sizes = [1, 64], strides = [1, 1]} : vector<32x64xf32> to vector<1x64xf32>
    %86 = vector.extract_strided_slice %58 {offsets = [17, 0], sizes = [1, 64], strides = [1, 1]} : vector<32x64xf32> to vector<1x64xf32>
    %87 = arith.maximumf %85, %86 : vector<1x64xf32>
    %88 = vector.extract_strided_slice %58 {offsets = [18, 0], sizes = [1, 64], strides = [1, 1]} : vector<32x64xf32> to vector<1x64xf32>
    %89 = vector.extract_strided_slice %58 {offsets = [19, 0], sizes = [1, 64], strides = [1, 1]} : vector<32x64xf32> to vector<1x64xf32>
    %90 = arith.maximumf %88, %89 : vector<1x64xf32>
    %91 = vector.extract_strided_slice %58 {offsets = [20, 0], sizes = [1, 64], strides = [1, 1]} : vector<32x64xf32> to vector<1x64xf32>
    %92 = vector.extract_strided_slice %58 {offsets = [21, 0], sizes = [1, 64], strides = [1, 1]} : vector<32x64xf32> to vector<1x64xf32>
    %93 = arith.maximumf %91, %92 : vector<1x64xf32>
    %94 = vector.extract_strided_slice %58 {offsets = [22, 0], sizes = [1, 64], strides = [1, 1]} : vector<32x64xf32> to vector<1x64xf32>
    %95 = vector.extract_strided_slice %58 {offsets = [23, 0], sizes = [1, 64], strides = [1, 1]} : vector<32x64xf32> to vector<1x64xf32>
    %96 = arith.maximumf %94, %95 : vector<1x64xf32>
    %97 = vector.extract_strided_slice %58 {offsets = [24, 0], sizes = [1, 64], strides = [1, 1]} : vector<32x64xf32> to vector<1x64xf32>
    %98 = vector.extract_strided_slice %58 {offsets = [25, 0], sizes = [1, 64], strides = [1, 1]} : vector<32x64xf32> to vector<1x64xf32>
    %99 = arith.maximumf %97, %98 : vector<1x64xf32>
    %100 = vector.extract_strided_slice %58 {offsets = [26, 0], sizes = [1, 64], strides = [1, 1]} : vector<32x64xf32> to vector<1x64xf32>
    %101 = vector.extract_strided_slice %58 {offsets = [27, 0], sizes = [1, 64], strides = [1, 1]} : vector<32x64xf32> to vector<1x64xf32>
    %102 = arith.maximumf %100, %101 : vector<1x64xf32>
    %103 = vector.extract_strided_slice %58 {offsets = [28, 0], sizes = [1, 64], strides = [1, 1]} : vector<32x64xf32> to vector<1x64xf32>
    %104 = vector.extract_strided_slice %58 {offsets = [29, 0], sizes = [1, 64], strides = [1, 1]} : vector<32x64xf32> to vector<1x64xf32>
    %105 = arith.maximumf %103, %104 : vector<1x64xf32>
    %106 = vector.extract_strided_slice %58 {offsets = [30, 0], sizes = [1, 64], strides = [1, 1]} : vector<32x64xf32> to vector<1x64xf32>
    %107 = vector.extract_strided_slice %58 {offsets = [31, 0], sizes = [1, 64], strides = [1, 1]} : vector<32x64xf32> to vector<1x64xf32>
    %108 = arith.maximumf %106, %107 : vector<1x64xf32>
    %109 = tpu.concatenate %87, %90, %93, %96, %99, %102, %105, %108 in 1 : vector<1x64xf32>, vector<1x64xf32>, vector<1x64xf32>, vector<1x64xf32>, vector<1x64xf32>, vector<1x64xf32>, vector<1x64xf32>, vector<1x64xf32> -> vector<1x512xf32>
    %c1_65 = arith.constant 1 : index
    %c0_66 = arith.constant 0 : index
    %110 = vector.load %arg12[%c1_65, %c0_66] : memref<2x512xf32, #tpu.memory_space<vmem>>, vector<1x512xf32>
    tpu.vector_store %arg12[%c1_65, %c0_66], %109 {strides = array<i32>} : memref<2x512xf32, #tpu.memory_space<vmem>>, vector<1x512xf32>,
    %c0_67 = arith.constant 0 : index
    %c0_68 = arith.constant 0 : index
    %111 = vector.load %arg12[%c0_67, %c0_68] : memref<2x512xf32, #tpu.memory_space<vmem>>, vector<2x512xf32>
    %c0_69 = arith.constant 0 : index
    %c0_70 = arith.constant 0 : index
    %112 = vector.load %arg5[%c0_69, %c0_70] : memref<512x32xf32, #tpu.memory_space<vmem>>, vector<512x32xf32>
    %cst_71 = arith.constant dense<0.000000e+00> : vector<2x32xf32>
    %113 = tpu.matmul %111, %112, %cst_71 {dimension_numbers = #tpu.dot_dimension_numbers<[1], [0], [0], [1], [0, 0, 1, 1], [], []>} : vector<2x512xf32>, vector<512x32xf32>, vector<2x32xf32> -> vector<2x32xf32>
    %c0_72 = arith.constant 0 : index
    %c0_73 = arith.constant 0 : index
    %114 = vector.load %arg6[%c0_72, %c0_73] : memref<1x32xf32, #tpu.memory_space<vmem>>, vector<1x32xf32>
    %115 = vector.broadcast %114 : vector<1x32xf32> to vector<2x32xf32>
    %116 = arith.addf %113, %115 : vector<2x32xf32>
    %cst_74 = arith.constant 0.000000e+00 : f32
    %117 = vector.broadcast %cst_74 : f32 to vector<2x32xf32>
    %118 = arith.maximumf %116, %117 : vector<2x32xf32>
    %c0_75 = arith.constant 0 : index
    %c0_76 = arith.constant 0 : index
    %119 = vector.load %arg7[%c0_75, %c0_76] : memref<32x10xf32, #tpu.memory_space<vmem>>, vector<32x10xf32>
    %cst_77 = arith.constant dense<0.000000e+00> : vector<2x10xf32>
    %120 = tpu.matmul %118, %119, %cst_77 {dimension_numbers = #tpu.dot_dimension_numbers<[1], [0], [0], [1], [0, 0, 1, 1], [], []>} : vector<2x32xf32>, vector<32x10xf32>, vector<2x10xf32> -> vector<2x10xf32>
    %c0_78 = arith.constant 0 : index
    %c0_79 = arith.constant 0 : index
    %121 = vector.load %arg8[%c0_78, %c0_79] : memref<1x10xf32, #tpu.memory_space<vmem>>, vector<1x10xf32>
    %122 = vector.broadcast %121 : vector<1x10xf32> to vector<2x10xf32>
    %123 = arith.addf %120, %122 : vector<2x10xf32>
    %c0_80 = arith.constant 0 : index
    %c0_81 = arith.constant 0 : index
    %124 = vector.load %arg9[%c0_80, %c0_81] : memref<2x10xf32, #tpu.memory_space<vmem>>, vector<2x10xf32>
    tpu.vector_store %arg9[%c0_80, %c0_81], %123 {strides = array<i32>} : memref<2x10xf32, #tpu.memory_space<vmem>>, vector<2x10xf32>,
    return
  }
}

</mosaic_0001>

<llo_original>
// kernel: tpu_custom_call.1
$region0: #{tpu_custom_call.1}
  #allocation0 [shape = 'u32[]', space=smem, size = 0x4, offset = 0x4, fixed_abs, tag = 'smem constant byte address 0x4 - core index']
  #allocation1 [shape = 'u32[144,128]{1,0:T(1,128)}', space=vmem, size = 0x12000, scoped, tag = 'internal scratch']
  #allocation2 [shape = 'f32[2,18,64]{2,1,0:T(8,128)}', space=vmem, size = 0x6000, scoped, tag = 'scratch operand']
  #allocation3 [shape = 'f32[2,18,128]{2,1,0:T(8,128)}', space=vmem, size = 0x6000, scoped, tag = 'scratch operand']
  #allocation4 [shape = 'f32[2,512]{1,0:T(2,128)}', space=vmem, size = 0x1000, scoped, tag = 'scratch operand']
  %s0 = inlined_call_operand.vmem [shape: f32[2,16,64], index: 0, kind: input, shape index: {}]
  %s1 = inlined_call_operand.vmem [shape: f32[3,64,128], index: 1, kind: input, shape index: {}]
  %s2 = inlined_call_operand.vmem [shape: f32[1,128], index: 2, kind: input, shape index: {}]
  %s3 = inlined_call_operand.vmem [shape: f32[3,128,128], index: 3, kind: input, shape index: {}]
  %s4 = inlined_call_operand.vmem [shape: f32[1,128], index: 4, kind: input, shape index: {}]
  %s5 = inlined_call_operand.vmem [shape: f32[512,32], index: 5, kind: input, shape index: {}]
  %s6 = inlined_call_operand.vmem [shape: f32[1,32], index: 6, kind: input, shape index: {}]
  %s7 = inlined_call_operand.vmem [shape: f32[32,10], index: 7, kind: input, shape index: {}]
  %s8 = inlined_call_operand.vmem [shape: f32[1,10], index: 8, kind: input, shape index: {}]
  %s9 = inlined_call_operand.hbm [shape: f32[2,10], index: 9, kind: output, shape index: {}]
  %s10 = sld [smem:[#allocation0]]
  $region46: #{tpu_custom_call.1} parent=0
    _
  %s12 = ssub.s32 1, %s10
  %s13 = scalar_select 0, %s12, %s10
  $region1: #{tpu_custom_call.1} parent=0
    #allocation5 [shape = 'u8[1024]{0}', space=vmem, size = 0x400, scoped, tag = 'output window, operand 0, single buffered']
    #allocation6 [shape = 's32[1]{0}', space=sflag, size = 0x4, scoped, tag = 'scoped memory for tpu_custom_call.1']
    %14 = vsyncpa [#allocation6], 0
    // Predicated region
    $region2: #{tpu_custom_call.1} parent=1 // pred_check
      _
    $region3: #{tpu_custom_call.1} parent=1 // pred_check_branch
      %16 = sbr.rel (0) target = $region5
    $region4: #{tpu_custom_call.1} parent=1 // pred_region
      _
    $region5: #{tpu_custom_call.1} parent=1 // pred_fallthru
      _
    // Predicated region
    $region6: #{tpu_custom_call.1} parent=1 // pred_check
      _
    $region7: #{tpu_custom_call.1} parent=1 // pred_check_branch
      %18 = sbr.rel (0) target = $region9
    $region8: #{tpu_custom_call.1} parent=1 // pred_region
      _
    $region9: #{tpu_custom_call.1} parent=1 // pred_fallthru
      _
    // Predicated region
    $region10: #{tpu_custom_call.1} parent=1 // pred_check
      _
    $region11: #{tpu_custom_call.1} parent=1 // pred_check_branch
      %20 = sbr.rel (0) target = $region13
    $region12: #{tpu_custom_call.1} parent=1 // pred_region
      _
    $region13: #{tpu_custom_call.1} parent=1 // pred_fallthru
      _
    // Predicated region
    $region14: #{tpu_custom_call.1} parent=1 // pred_check
      _
    $region15: #{tpu_custom_call.1} parent=1 // pred_check_branch
      %22 = sbr.rel (0) target = $region17
    $region16: #{tpu_custom_call.1} parent=1 // pred_region
      _
    $region17: #{tpu_custom_call.1} parent=1 // pred_fallthru
      _
    // Predicated region
    $region18: #{tpu_custom_call.1} parent=1 // pred_check
      _
    $region19: #{tpu_custom_call.1} parent=1 // pred_check_branch
      %24 = sbr.rel (0) target = $region21
    $region20: #{tpu_custom_call.1} parent=1 // pred_region
      _
    $region21: #{tpu_custom_call.1} parent=1 // pred_fallthru
      _
    // Predicated region
    $region22: #{tpu_custom_call.1} parent=1 // pred_check
      _
    $region23: #{tpu_custom_call.1} parent=1 // pred_check_branch
      %26 = sbr.rel (0) target = $region25
    $region24: #{tpu_custom_call.1} parent=1 // pred_region
      _
    $region25: #{tpu_custom_call.1} parent=1 // pred_fallthru
      _
    // Predicated region
    $region26: #{tpu_custom_call.1} parent=1 // pred_check
      _
    $region27: #{tpu_custom_call.1} parent=1 // pred_check_branch
      %28 = sbr.rel (0) target = $region29
    $region28: #{tpu_custom_call.1} parent=1 // pred_region
      _
    $region29: #{tpu_custom_call.1} parent=1 // pred_fallthru
      _
    // Predicated region
    $region30: #{tpu_custom_call.1} parent=1 // pred_check
      _
    $region31: #{tpu_custom_call.1} parent=1 // pred_check_branch
      %30 = sbr.rel (0) target = $region33
    $region32: #{tpu_custom_call.1} parent=1 // pred_region
      _
    $region33: #{tpu_custom_call.1} parent=1 // pred_fallthru
      _
    // Predicated region
    $region34: #{tpu_custom_call.1} parent=1 // pred_check
      _
    $region35: #{tpu_custom_call.1} parent=1 // pred_check_branch
      %32 = sbr.rel (0) target = $region37
    $region36: #{tpu_custom_call.1} parent=1 // pred_region
      _
    $region37: #{tpu_custom_call.1} parent=1 // pred_fallthru
      _
    %v33 = vld [vmem:[%s0] sm:$0xff]
    %v34 = vld [vmem:[%s0 + $0x8] sm:$0xff]
    %v35 = vld [vmem:[%s0 + $0x10] sm:$0xff]
    %v36 = vld [vmem:[%s0 + $0x18] sm:$0xff]
    %vm37 = vcmask 523264
    %38 = vst.msk [vmem:[#allocation2] sm:$0xff] %vm37, 0.0
    %39 = vst.msk [vmem:[#allocation2 + $0x8] sm:$0xff] %vm37, 0.0
    %vm40 = vcmask 517120
    %41 = vst.msk [vmem:[#allocation2 + $0x10] sm:$0x3] %vm40, 0.0
    %42 = vst.msk [vmem:[#allocation2 + $0x18] sm:$0xff] %vm37, 0.0
    %43 = vst.msk [vmem:[#allocation2 + $0x20] sm:$0xff] %vm37, 0.0
    %44 = vst.msk [vmem:[#allocation2 + $0x28] sm:$0x3] %vm40, 0.0
    %45 = vst.msk [vmem:[#allocation2 + $0x1] sm:$0xff] %vm37, %v33
    %46 = vst.msk [vmem:[#allocation2 + $0x9] sm:$0xff] %vm37, %v34
    %47 = vst.msk [vmem:[#allocation2 + $0x19] sm:$0xff] %vm37, %v35
    %48 = vst.msk [vmem:[#allocation2 + $0x21] sm:$0xff] %vm37, %v36
    %v49 = vld [vmem:[#allocation2] sm:$0xff]
    %v50 = vld [vmem:[#allocation2 + $0x8] sm:$0xff]
    %v51 = vld [vmem:[#allocation2 + $0x18] sm:$0xff]
    %v52 = vld [vmem:[#allocation2 + $0x20] sm:$0xff]
    %v53 = vld [vmem:[%s1] sm:$0xff]
    %v54 = vld [vmem:[%s1 + $0x8] sm:$0xff]
    %v55 = vld [vmem:[%s1 + $0x10] sm:$0xff]
    %v56 = vld [vmem:[%s1 + $0x18] sm:$0xff]
    %v57 = vld [vmem:[%s1 + $0x20] sm:$0xff]
    %v58 = vld [vmem:[%s1 + $0x28] sm:$0xff]
    %v59 = vld [vmem:[%s1 + $0x30] sm:$0xff]
    %v60 = vld [vmem:[%s1 + $0x38] sm:$0xff]
    %v61 = vld [vmem:[#allocation2 + $0x1] sm:$0xff]
    %v62 = vld [vmem:[#allocation2 + $0x9] sm:$0xff]
    %v63 = vld [vmem:[#allocation2 + $0x19] sm:$0xff]
    %v64 = vld [vmem:[#allocation2 + $0x21] sm:$0xff]
    %s65 = scalar_lea.vmem %s1, 64
    %v66 = vld [vmem:[%s65] sm:$0xff]
    %v67 = vld [vmem:[%s65 + $0x8] sm:$0xff]
    %v68 = vld [vmem:[%s65 + $0x10] sm:$0xff]
    %v69 = vld [vmem:[%s65 + $0x18] sm:$0xff]
    %v70 = vld [vmem:[%s65 + $0x20] sm:$0xff]
    %v71 = vld [vmem:[%s65 + $0x28] sm:$0xff]
    %v72 = vld [vmem:[%s65 + $0x30] sm:$0xff]
    %v73 = vld [vmem:[%s65 + $0x38] sm:$0xff]
    %v75 = vsel %vm37, %v61, 0
    %v78 = vsel %vm37, %v62, 0
    %v81 = vsel %vm37, %v63, 0
    %v84 = vsel %vm37, %v64, 0
    %86 = vmatprep.subr.mxu0 0.0
    %87 = vmatpush1.msra.mxu0 %v66
    %88 = vmatprep.subr.mxu0 0.0
    %89 = vmatpush1.msra.mxu0 %v67
    %90 = vmatprep.subr.mxu0 0.0
    %91 = vmatpush1.msra.mxu0 %v68
    %92 = vmatprep.subr.mxu0 0.0
    %93 = vmatpush1.msra.mxu0 %v69
    %94 = vmatprep.subr.mxu0 0.0
    %95 = vmatpush1.msra.mxu0 %v70
    %96 = vmatprep.subr.mxu0 0.0
    %97 = vmatpush1.msra.mxu0 %v71
    %98 = vmatprep.subr.mxu0 0.0
    %99 = vmatpush1.msra.mxu0 %v72
    %100 = vmatprep.subr.mxu0 0.0
    %101 = vmatpush1.msra.mxu0 %v73
    %102 = vmatprep.subr.mxu0 0.0
    %103 = vmatpush1.msra.mxu0 0.0
    %104 = vmatprep.subr.mxu0 0.0
    %105 = vmatpush1.msra.mxu0 0.0
    %106 = vmatprep.subr.mxu0 0.0
    %107 = vmatpush1.msra.mxu0 0.0
    %108 = vmatprep.subr.mxu0 0.0
    %109 = vmatpush1.msra.mxu0 0.0
    %110 = vmatprep.subr.mxu0 0.0
    %111 = vmatpush1.msra.mxu0 0.0
    %112 = vmatprep.subr.mxu0 0.0
    %113 = vmatpush1.msra.mxu0 0.0
    %114 = vmatprep.subr.mxu0 0.0
    %115 = vmatpush1.msra.mxu0 0.0
    %116 = vmatprep.subr.mxu0 0.0
    %117 = vmatpush1.msra.mxu0 0.0
    %118 = vmatprep.subr.mxu0 0.0
    %119 = vmatpush1.msra.mxu0 0.0
    %120 = vmatprep.subr.mxu0 0.0
    %121 = vmatpush1.msra.mxu0 0.0
    %122 = vmatprep.subr.mxu0 0.0
    %123 = vmatpush1.msra.mxu0 0.0
    %124 = vmatprep.subr.mxu0 0.0
    %125 = vmatpush1.msra.mxu0 0.0
    %126 = vmatprep.subr.mxu0 0.0
    %127 = vmatpush1.msra.mxu0 0.0
    %128 = vmatprep.subr.mxu0 0.0
    %129 = vmatpush1.msra.mxu0 0.0
    %130 = vmatprep.subr.mxu0 0.0
    %131 = vmatpush1.msra.mxu0 0.0
    %132 = vmatprep.subr.mxu0 0.0
    %133 = vmatpush1.msra.mxu0 0.0
    %134 = vmatprep.subr.mxu0 0.0
    %135 = vmatpush1.msra.mxu0 0.0
    %136 = vmatprep.subr.mxu0 0.0
    %137 = vmatpush1.msra.mxu0 0.0
    %138 = vmatprep.subr.mxu0 0.0
    %139 = vmatpush1.msra.mxu0 0.0
    %140 = vmatprep.subr.mxu0 0.0
    %141 = vmatpush1.msra.mxu0 0.0
    %142 = vmatprep.subr.mxu0 0.0
    %143 = vmatpush1.msra.mxu0 0.0
    %144 = vmatprep.subr.mxu0 0.0
    %145 = vmatpush1.msra.mxu0 0.0
    %146 = vmatprep.subr.mxu0 0.0
    %147 = vmatpush1.msra.mxu0 0.0
    %148 = vmatprep.subr.mxu0 0.0
    %149 = vmatpush1.msra.mxu0 0.0
    %150 = vmatprep.mubr.f32.mxu0 0.0
    %151 = vmatmul.mubr.f32.gmra.mrb[0].mxu0 %v75
    %v152 = vpop.f32.mrb[0].mxu0
    %v153 = vadd.f32 0.0, %v152
    %v154 = vpop.f32.mrb[0].mxu0
    %155 = vmatprep.mubr.f32.mxu0 0.0
    %156 = vmatmul.mubr.f32.gmra.mrb[0].mxu0 %v78
    %v157 = vpop.f32.mrb[0].mxu0
    %v158 = vadd.f32 0.0, %v157
    %v159 = vpop.f32.mrb[0].mxu0
    %160 = vmatprep.mubr.f32.mxu0 0.0
    %161 = vmatmul.mubr.f32.gmra.mrb[0].mxu0 %v81
    %v162 = vpop.f32.mrb[0].mxu0
    %v163 = vadd.f32 0.0, %v162
    %v164 = vpop.f32.mrb[0].mxu0
    %165 = vmatprep.mubr.f32.mxu0 0.0
    %166 = vmatmul.mubr.f32.gmra.mrb[0].mxu0 %v84
    %v167 = vpop.f32.mrb[0].mxu0
    %v168 = vadd.f32 0.0, %v167
    %v169 = vpop.f32.mrb[0].mxu0
    %170 = vdwg.mxu0
    %v172 = vsel %vm37, %v49, 0
    %v175 = vsel %vm37, %v50, 0
    %v178 = vsel %vm37, %v51, 0
    %v181 = vsel %vm37, %v52, 0
    %183 = vmatprep.subr.mxu0 0.0
    %184 = vmatpush1.msra.mxu0 %v53
    %185 = vmatprep.subr.mxu0 0.0
    %186 = vmatpush1.msra.mxu0 %v54
    %187 = vmatprep.subr.mxu0 0.0
    %188 = vmatpush1.msra.mxu0 %v55
    %189 = vmatprep.subr.mxu0 0.0
    %190 = vmatpush1.msra.mxu0 %v56
    %191 = vmatprep.subr.mxu0 0.0
    %192 = vmatpush1.msra.mxu0 %v57
    %193 = vmatprep.subr.mxu0 0.0
    %194 = vmatpush1.msra.mxu0 %v58
    %195 = vmatprep.subr.mxu0 0.0
    %196 = vmatpush1.msra.mxu0 %v59
    %197 = vmatprep.subr.mxu0 0.0
    %198 = vmatpush1.msra.mxu0 %v60
    %199 = vmatprep.subr.mxu0 0.0
    %200 = vmatpush1.msra.mxu0 0.0
    %201 = vmatprep.subr.mxu0 0.0
    %202 = vmatpush1.msra.mxu0 0.0
    %203 = vmatprep.subr.mxu0 0.0
    %204 = vmatpush1.msra.mxu0 0.0
    %205 = vmatprep.subr.mxu0 0.0
    %206 = vmatpush1.msra.mxu0 0.0
    %207 = vmatprep.subr.mxu0 0.0
    %208 = vmatpush1.msra.mxu0 0.0
    %209 = vmatprep.subr.mxu0 0.0
    %210 = vmatpush1.msra.mxu0 0.0
    %211 = vmatprep.subr.mxu0 0.0
    %212 = vmatpush1.msra.mxu0 0.0
    %213 = vmatprep.subr.mxu0 0.0
    %214 = vmatpush1.msra.mxu0 0.0
    %215 = vmatprep.subr.mxu0 0.0
    %216 = vmatpush1.msra.mxu0 0.0
    %217 = vmatprep.subr.mxu0 0.0
    %218 = vmatpush1.msra.mxu0 0.0
    %219 = vmatprep.subr.mxu0 0.0
    %220 = vmatpush1.msra.mxu0 0.0
    %221 = vmatprep.subr.mxu0 0.0
    %222 = vmatpush1.msra.mxu0 0.0
    %223 = vmatprep.subr.mxu0 0.0
    %224 = vmatpush1.msra.mxu0 0.0
    %225 = vmatprep.subr.mxu0 0.0
    %226 = vmatpush1.msra.mxu0 0.0
    %227 = vmatprep.subr.mxu0 0.0
    %228 = vmatpush1.msra.mxu0 0.0
    %229 = vmatprep.subr.mxu0 0.0
    %230 = vmatpush1.msra.mxu0 0.0
    %231 = vmatprep.subr.mxu0 0.0
    %232 = vmatpush1.msra.mxu0 0.0
    %233 = vmatprep.subr.mxu0 0.0
    %234 = vmatpush1.msra.mxu0 0.0
    %235 = vmatprep.subr.mxu0 0.0
    %236 = vmatpush1.msra.mxu0 0.0
    %237 = vmatprep.subr.mxu0 0.0
    %238 = vmatpush1.msra.mxu0 0.0
    %239 = vmatprep.subr.mxu0 0.0
    %240 = vmatpush1.msra.mxu0 0.0
    %241 = vmatprep.subr.mxu0 0.0
    %242 = vmatpush1.msra.mxu0 0.0
    %243 = vmatprep.subr.mxu0 0.0
    %244 = vmatpush1.msra.mxu0 0.0
    %245 = vmatprep.subr.mxu0 0.0
    %246 = vmatpush1.msra.mxu0 0.0
    %247 = vmatprep.mubr.f32.mxu0 0.0
    %248 = vmatmul.mubr.f32.gmra.mrb[0].mxu0 %v172
    %v249 = vpop.f32.mrb[0].mxu0
    %v250 = vadd.f32 %v153, %v249
    %v251 = vpop.f32.mrb[0].mxu0
    %252 = vmatprep.mubr.f32.mxu0 0.0
    %253 = vmatmul.mubr.f32.gmra.mrb[0].mxu0 %v175
    %v254 = vpop.f32.mrb[0].mxu0
    %v255 = vadd.f32 %v158, %v254
    %v256 = vpop.f32.mrb[0].mxu0
    %257 = vmatprep.mubr.f32.mxu0 0.0
    %258 = vmatmul.mubr.f32.gmra.mrb[0].mxu0 %v178
    %v259 = vpop.f32.mrb[0].mxu0
    %v260 = vadd.f32 %v163, %v259
    %v261 = vpop.f32.mrb[0].mxu0
    %262 = vmatprep.mubr.f32.mxu0 0.0
    %263 = vmatmul.mubr.f32.gmra.mrb[0].mxu0 %v181
    %v264 = vpop.f32.mrb[0].mxu0
    %v265 = vadd.f32 %v168, %v264
    %v266 = vpop.f32.mrb[0].mxu0
    %267 = vdwg.mxu0
    %v268 = vld [vmem:[#allocation2 + $0x2] sm:$0xff]
    %v269 = vld [vmem:[#allocation2 + $0xa] sm:$0xff]
    %v270 = vld [vmem:[#allocation2 + $0x1a] sm:$0xff]
    %v271 = vld [vmem:[#allocation2 + $0x22] sm:$0xff]
    %s272 = scalar_lea.vmem %s1, 128
    %v273 = vld [vmem:[%s272] sm:$0xff]
    %v274 = vld [vmem:[%s272 + $0x8] sm:$0xff]
    %v275 = vld [vmem:[%s272 + $0x10] sm:$0xff]
    %v276 = vld [vmem:[%s272 + $0x18] sm:$0xff]
    %v277 = vld [vmem:[%s272 + $0x20] sm:$0xff]
    %v278 = vld [vmem:[%s272 + $0x28] sm:$0xff]
    %v279 = vld [vmem:[%s272 + $0x30] sm:$0xff]
    %v280 = vld [vmem:[%s272 + $0x38] sm:$0xff]
    %v282 = vsel %vm37, %v268, 0
    %v285 = vsel %vm37, %v269, 0
    %v288 = vsel %vm37, %v270, 0
    %v291 = vsel %vm37, %v271, 0
    %293 = vmatprep.subr.mxu0 0.0
    %294 = vmatpush1.msra.mxu0 %v273
    %295 = vmatprep.subr.mxu0 0.0
    %296 = vmatpush1.msra.mxu0 %v274
    %297 = vmatprep.subr.mxu0 0.0
    %298 = vmatpush1.msra.mxu0 %v275
    %299 = vmatprep.subr.mxu0 0.0
    %300 = vmatpush1.msra.mxu0 %v276
    %301 = vmatprep.subr.mxu0 0.0
    %302 = vmatpush1.msra.mxu0 %v277
    %303 = vmatprep.subr.mxu0 0.0
    %304 = vmatpush1.msra.mxu0 %v278
    %305 = vmatprep.subr.mxu0 0.0
    %306 = vmatpush1.msra.mxu0 %v279
    %307 = vmatprep.subr.mxu0 0.0
    %308 = vmatpush1.msra.mxu0 %v280
    %309 = vmatprep.subr.mxu0 0.0
    %310 = vmatpush1.msra.mxu0 0.0
    %311 = vmatprep.subr.mxu0 0.0
    %312 = vmatpush1.msra.mxu0 0.0
    %313 = vmatprep.subr.mxu0 0.0
    %314 = vmatpush1.msra.mxu0 0.0
    %315 = vmatprep.subr.mxu0 0.0
    %316 = vmatpush1.msra.mxu0 0.0
    %317 = vmatprep.subr.mxu0 0.0
    %318 = vmatpush1.msra.mxu0 0.0
    %319 = vmatprep.subr.mxu0 0.0
    %320 = vmatpush1.msra.mxu0 0.0
    %321 = vmatprep.subr.mxu0 0.0
    %322 = vmatpush1.msra.mxu0 0.0
    %323 = vmatprep.subr.mxu0 0.0
    %324 = vmatpush1.msra.mxu0 0.0
    %325 = vmatprep.subr.mxu0 0.0
    %326 = vmatpush1.msra.mxu0 0.0
    %327 = vmatprep.subr.mxu0 0.0
    %328 = vmatpush1.msra.mxu0 0.0
    %329 = vmatprep.subr.mxu0 0.0
    %330 = vmatpush1.msra.mxu0 0.0
    %331 = vmatprep.subr.mxu0 0.0
    %332 = vmatpush1.msra.mxu0 0.0
    %333 = vmatprep.subr.mxu0 0.0
    %334 = vmatpush1.msra.mxu0 0.0
    %335 = vmatprep.subr.mxu0 0.0
    %336 = vmatpush1.msra.mxu0 0.0
    %337 = vmatprep.subr.mxu0 0.0
    %338 = vmatpush1.msra.mxu0 0.0
    %339 = vmatprep.subr.mxu0 0.0
    %340 = vmatpush1.msra.mxu0 0.0
    %341 = vmatprep.subr.mxu0 0.0
    %342 = vmatpush1.msra.mxu0 0.0
    %343 = vmatprep.subr.mxu0 0.0
    %344 = vmatpush1.msra.mxu0 0.0
    %345 = vmatprep.subr.mxu0 0.0
    %346 = vmatpush1.msra.mxu0 0.0
    %347 = vmatprep.subr.mxu0 0.0
    %348 = vmatpush1.msra.mxu0 0.0
    %349 = vmatprep.subr.mxu0 0.0
    %350 = vmatpush1.msra.mxu0 0.0
    %351 = vmatprep.subr.mxu0 0.0
    %352 = vmatpush1.msra.mxu0 0.0
    %353 = vmatprep.subr.mxu0 0.0
    %354 = vmatpush1.msra.mxu0 0.0
    %355 = vmatprep.subr.mxu0 0.0
    %356 = vmatpush1.msra.mxu0 0.0
    %357 = vmatprep.mubr.f32.mxu0 0.0
    %358 = vmatmul.mubr.f32.gmra.mrb[0].mxu0 %v282
    %v359 = vpop.f32.mrb[0].mxu0
    %v360 = vadd.f32 0.0, %v359
    %v361 = vpop.f32.mrb[0].mxu0
    %362 = vmatprep.mubr.f32.mxu0 0.0
    %363 = vmatmul.mubr.f32.gmra.mrb[0].mxu0 %v285
    %v364 = vpop.f32.mrb[0].mxu0
    %v365 = vadd.f32 0.0, %v364
    %v366 = vpop.f32.mrb[0].mxu0
    %367 = vmatprep.mubr.f32.mxu0 0.0
    %368 = vmatmul.mubr.f32.gmra.mrb[0].mxu0 %v288
    %v369 = vpop.f32.mrb[0].mxu0
    %v370 = vadd.f32 0.0, %v369
    %v371 = vpop.f32.mrb[0].mxu0
    %372 = vmatprep.mubr.f32.mxu0 0.0
    %373 = vmatmul.mubr.f32.gmra.mrb[0].mxu0 %v291
    %v374 = vpop.f32.mrb[0].mxu0
    %v375 = vadd.f32 0.0, %v374
    %v376 = vpop.f32.mrb[0].mxu0
    %377 = vdwg.mxu0
    %v378 = vadd.f32 %v250, %v360
    %v379 = vadd.f32 %v255, %v365
    %v380 = vadd.f32 %v260, %v370
    %v381 = vadd.f32 %v265, %v375
    %v382 = vld [vmem:[%s2] sm:$0x1]
    %v384 = vlaneseq
    %v385 = vshrl.u32 %v384, 7
    %v386 = vsub.s32 0, %v385
    %v387 = vrot.slane %v382, %v386
    %v389 = vadd.f32 %v378, %v387
    %v390 = vadd.f32 %v379, %v387
    %v391 = vadd.f32 %v380, %v387
    %v392 = vadd.f32 %v381, %v387
    %v393 = vmax.f32 %v389, 0.0
    %v394 = vmax.f32 %v390, 0.0
    %v395 = vmax.f32 %v391, 0.0
    %v396 = vmax.f32 %v392, 0.0
    %397 = vst [vmem:[#allocation3] sm:$0xff] 0.0
    %398 = vst [vmem:[#allocation3 + $0x8] sm:$0xff] 0.0
    %399 = vst [vmem:[#allocation3 + $0x10] sm:$0x3] 0.0
    %400 = vst [vmem:[#allocation3 + $0x18] sm:$0xff] 0.0
    %401 = vst [vmem:[#allocation3 + $0x20] sm:$0xff] 0.0
    %402 = vst [vmem:[#allocation3 + $0x28] sm:$0x3] 0.0
    %403 = vst [vmem:[#allocation3 + $0x1] sm:$0xff] %v393
    %404 = vst [vmem:[#allocation3 + $0x9] sm:$0xff] %v394
    %405 = vst [vmem:[#allocation3 + $0x19] sm:$0xff] %v395
    %406 = vst [vmem:[#allocation3 + $0x21] sm:$0xff] %v396
    %v407 = vld [vmem:[#allocation3] sm:$0xff]
    %v408 = vld [vmem:[#allocation3 + $0x8] sm:$0xff]
    %v409 = vld [vmem:[#allocation3 + $0x18] sm:$0xff]
    %v410 = vld [vmem:[#allocation3 + $0x20] sm:$0xff]
    %v411 = vld [vmem:[%s3] sm:$0xff]
    %v412 = vld [vmem:[%s3 + $0x8] sm:$0xff]
    %v413 = vld [vmem:[%s3 + $0x10] sm:$0xff]
    %v414 = vld [vmem:[%s3 + $0x18] sm:$0xff]
    %v415 = vld [vmem:[%s3 + $0x20] sm:$0xff]
    %v416 = vld [vmem:[%s3 + $0x28] sm:$0xff]
    %v417 = vld [vmem:[%s3 + $0x30] sm:$0xff]
    %v418 = vld [vmem:[%s3 + $0x38] sm:$0xff]
    %v419 = vld [vmem:[%s3 + $0x40] sm:$0xff]
    %v420 = vld [vmem:[%s3 + $0x48] sm:$0xff]
    %v421 = vld [vmem:[%s3 + $0x50] sm:$0xff]
    %v422 = vld [vmem:[%s3 + $0x58] sm:$0xff]
    %v423 = vld [vmem:[%s3 + $0x60] sm:$0xff]
    %v424 = vld [vmem:[%s3 + $0x68] sm:$0xff]
    %v425 = vld [vmem:[%s3 + $0x70] sm:$0xff]
    %v426 = vld [vmem:[%s3 + $0x78] sm:$0xff]
    %v427 = vld [vmem:[#allocation3 + $0x1] sm:$0xff]
    %v428 = vld [vmem:[#allocation3 + $0x9] sm:$0xff]
    %v429 = vld [vmem:[#allocation3 + $0x19] sm:$0xff]
    %v430 = vld [vmem:[#allocation3 + $0x21] sm:$0xff]
    %s431 = scalar_lea.vmem %s3, 128
    %v432 = vld [vmem:[%s431] sm:$0xff]
    %v433 = vld [vmem:[%s431 + $0x8] sm:$0xff]
    %v434 = vld [vmem:[%s431 + $0x10] sm:$0xff]
    %v435 = vld [vmem:[%s431 + $0x18] sm:$0xff]
    %v436 = vld [vmem:[%s431 + $0x20] sm:$0xff]
    %v437 = vld [vmem:[%s431 + $0x28] sm:$0xff]
    %v438 = vld [vmem:[%s431 + $0x30] sm:$0xff]
    %v439 = vld [vmem:[%s431 + $0x38] sm:$0xff]
    %v440 = vld [vmem:[%s431 + $0x40] sm:$0xff]
    %v441 = vld [vmem:[%s431 + $0x48] sm:$0xff]
    %v442 = vld [vmem:[%s431 + $0x50] sm:$0xff]
    %v443 = vld [vmem:[%s431 + $0x58] sm:$0xff]
    %v444 = vld [vmem:[%s431 + $0x60] sm:$0xff]
    %v445 = vld [vmem:[%s431 + $0x68] sm:$0xff]
    %v446 = vld [vmem:[%s431 + $0x70] sm:$0xff]
    %v447 = vld [vmem:[%s431 + $0x78] sm:$0xff]
    %448 = vmatprep.subr.mxu0 0.0
    %449 = vmatpush1.msra.mxu0 %v432
    %450 = vmatprep.subr.mxu0 0.0
    %451 = vmatpush1.msra.mxu0 %v433
    %452 = vmatprep.subr.mxu0 0.0
    %453 = vmatpush1.msra.mxu0 %v434
    %454 = vmatprep.subr.mxu0 0.0
    %455 = vmatpush1.msra.mxu0 %v435
    %456 = vmatprep.subr.mxu0 0.0
    %457 = vmatpush1.msra.mxu0 %v436
    %458 = vmatprep.subr.mxu0 0.0
    %459 = vmatpush1.msra.mxu0 %v437
    %460 = vmatprep.subr.mxu0 0.0
    %461 = vmatpush1.msra.mxu0 %v438
    %462 = vmatprep.subr.mxu0 0.0
    %463 = vmatpush1.msra.mxu0 %v439
    %464 = vmatprep.subr.mxu0 0.0
    %465 = vmatpush1.msra.mxu0 %v440
    %466 = vmatprep.subr.mxu0 0.0
    %467 = vmatpush1.msra.mxu0 %v441
    %468 = vmatprep.subr.mxu0 0.0
    %469 = vmatpush1.msra.mxu0 %v442
    %470 = vmatprep.subr.mxu0 0.0
    %471 = vmatpush1.msra.mxu0 %v443
    %472 = vmatprep.subr.mxu0 0.0
    %473 = vmatpush1.msra.mxu0 %v444
    %474 = vmatprep.subr.mxu0 0.0
    %475 = vmatpush1.msra.mxu0 %v445
    %476 = vmatprep.subr.mxu0 0.0
    %477 = vmatpush1.msra.mxu0 %v446
    %478 = vmatprep.subr.mxu0 0.0
    %479 = vmatpush1.msra.mxu0 %v447
    %480 = vmatprep.subr.mxu0 0.0
    %481 = vmatpush1.msra.mxu0 0.0
    %482 = vmatprep.subr.mxu0 0.0
    %483 = vmatpush1.msra.mxu0 0.0
    %484 = vmatprep.subr.mxu0 0.0
    %485 = vmatpush1.msra.mxu0 0.0
    %486 = vmatprep.subr.mxu0 0.0
    %487 = vmatpush1.msra.mxu0 0.0
    %488 = vmatprep.subr.mxu0 0.0
    %489 = vmatpush1.msra.mxu0 0.0
    %490 = vmatprep.subr.mxu0 0.0
    %491 = vmatpush1.msra.mxu0 0.0
    %492 = vmatprep.subr.mxu0 0.0
    %493 = vmatpush1.msra.mxu0 0.0
    %494 = vmatprep.subr.mxu0 0.0
    %495 = vmatpush1.msra.mxu0 0.0
    %496 = vmatprep.subr.mxu0 0.0
    %497 = vmatpush1.msra.mxu0 0.0
    %498 = vmatprep.subr.mxu0 0.0
    %499 = vmatpush1.msra.mxu0 0.0
    %500 = vmatprep.subr.mxu0 0.0
    %501 = vmatpush1.msra.mxu0 0.0
    %502 = vmatprep.subr.mxu0 0.0
    %503 = vmatpush1.msra.mxu0 0.0
    %504 = vmatprep.subr.mxu0 0.0
    %505 = vmatpush1.msra.mxu0 0.0
    %506 = vmatprep.subr.mxu0 0.0
    %507 = vmatpush1.msra.mxu0 0.0
    %508 = vmatprep.subr.mxu0 0.0
    %509 = vmatpush1.msra.mxu0 0.0
    %510 = vmatprep.subr.mxu0 0.0
    %511 = vmatpush1.msra.mxu0 0.0
    %512 = vmatprep.mubr.f32.mxu0 0.0
    %513 = vmatmul.mubr.f32.gmra.mrb[0].mxu0 %v427
    %v514 = vpop.f32.mrb[0].mxu0
    %v515 = vadd.f32 0.0, %v514
    %v516 = vpop.f32.mrb[0].mxu0
    %517 = vmatprep.mubr.f32.mxu0 0.0
    %518 = vmatmul.mubr.f32.gmra.mrb[0].mxu0 %v428
    %v519 = vpop.f32.mrb[0].mxu0
    %v520 = vadd.f32 0.0, %v519
    %v521 = vpop.f32.mrb[0].mxu0
    %522 = vmatprep.mubr.f32.mxu0 0.0
    %523 = vmatmul.mubr.f32.gmra.mrb[0].mxu0 %v429
    %v524 = vpop.f32.mrb[0].mxu0
    %v525 = vadd.f32 0.0, %v524
    %v526 = vpop.f32.mrb[0].mxu0
    %527 = vmatprep.mubr.f32.mxu0 0.0
    %528 = vmatmul.mubr.f32.gmra.mrb[0].mxu0 %v430
    %v529 = vpop.f32.mrb[0].mxu0
    %v530 = vadd.f32 0.0, %v529
    %v531 = vpop.f32.mrb[0].mxu0
    %532 = vdwg.mxu0
    %533 = vmatprep.subr.mxu0 0.0
    %534 = vmatpush1.msra.mxu0 %v411
    %535 = vmatprep.subr.mxu0 0.0
    %536 = vmatpush1.msra.mxu0 %v412
    %537 = vmatprep.subr.mxu0 0.0
    %538 = vmatpush1.msra.mxu0 %v413
    %539 = vmatprep.subr.mxu0 0.0
    %540 = vmatpush1.msra.mxu0 %v414
    %541 = vmatprep.subr.mxu0 0.0
    %542 = vmatpush1.msra.mxu0 %v415
    %543 = vmatprep.subr.mxu0 0.0
    %544 = vmatpush1.msra.mxu0 %v416
    %545 = vmatprep.subr.mxu0 0.0
    %546 = vmatpush1.msra.mxu0 %v417
    %547 = vmatprep.subr.mxu0 0.0
    %548 = vmatpush1.msra.mxu0 %v418
    %549 = vmatprep.subr.mxu0 0.0
    %550 = vmatpush1.msra.mxu0 %v419
    %551 = vmatprep.subr.mxu0 0.0
    %552 = vmatpush1.msra.mxu0 %v420
    %553 = vmatprep.subr.mxu0 0.0
    %554 = vmatpush1.msra.mxu0 %v421
    %555 = vmatprep.subr.mxu0 0.0
    %556 = vmatpush1.msra.mxu0 %v422
    %557 = vmatprep.subr.mxu0 0.0
    %558 = vmatpush1.msra.mxu0 %v423
    %559 = vmatprep.subr.mxu0 0.0
    %560 = vmatpush1.msra.mxu0 %v424
    %561 = vmatprep.subr.mxu0 0.0
    %562 = vmatpush1.msra.mxu0 %v425
    %563 = vmatprep.subr.mxu0 0.0
    %564 = vmatpush1.msra.mxu0 %v426
    %565 = vmatprep.subr.mxu0 0.0
    %566 = vmatpush1.msra.mxu0 0.0
    %567 = vmatprep.subr.mxu0 0.0
    %568 = vmatpush1.msra.mxu0 0.0
    %569 = vmatprep.subr.mxu0 0.0
    %570 = vmatpush1.msra.mxu0 0.0
    %571 = vmatprep.subr.mxu0 0.0
    %572 = vmatpush1.msra.mxu0 0.0
    %573 = vmatprep.subr.mxu0 0.0
    %574 = vmatpush1.msra.mxu0 0.0
    %575 = vmatprep.subr.mxu0 0.0
    %576 = vmatpush1.msra.mxu0 0.0
    %577 = vmatprep.subr.mxu0 0.0
    %578 = vmatpush1.msra.mxu0 0.0
    %579 = vmatprep.subr.mxu0 0.0
    %580 = vmatpush1.msra.mxu0 0.0
    %581 = vmatprep.subr.mxu0 0.0
    %582 = vmatpush1.msra.mxu0 0.0
    %583 = vmatprep.subr.mxu0 0.0
    %584 = vmatpush1.msra.mxu0 0.0
    %585 = vmatprep.subr.mxu0 0.0
    %586 = vmatpush1.msra.mxu0 0.0
    %587 = vmatprep.subr.mxu0 0.0
    %588 = vmatpush1.msra.mxu0 0.0
    %589 = vmatprep.subr.mxu0 0.0
    %590 = vmatpush1.msra.mxu0 0.0
    %591 = vmatprep.subr.mxu0 0.0
    %592 = vmatpush1.msra.mxu0 0.0
    %593 = vmatprep.subr.mxu0 0.0
    %594 = vmatpush1.msra.mxu0 0.0
    %595 = vmatprep.subr.mxu0 0.0
    %596 = vmatpush1.msra.mxu0 0.0
    %597 = vmatprep.mubr.f32.mxu0 0.0
    %598 = vmatmul.mubr.f32.gmra.mrb[0].mxu0 %v407
    %v599 = vpop.f32.mrb[0].mxu0
    %v600 = vadd.f32 %v515, %v599
    %v601 = vpop.f32.mrb[0].mxu0
    %602 = vmatprep.mubr.f32.mxu0 0.0
    %603 = vmatmul.mubr.f32.gmra.mrb[0].mxu0 %v408
    %v604 = vpop.f32.mrb[0].mxu0
    %v605 = vadd.f32 %v520, %v604
    %v606 = vpop.f32.mrb[0].mxu0
    %607 = vmatprep.mubr.f32.mxu0 0.0
    %608 = vmatmul.mubr.f32.gmra.mrb[0].mxu0 %v409
    %v609 = vpop.f32.mrb[0].mxu0
    %v610 = vadd.f32 %v525, %v609
    %v611 = vpop.f32.mrb[0].mxu0
    %612 = vmatprep.mubr.f32.mxu0 0.0
    %613 = vmatmul.mubr.f32.gmra.mrb[0].mxu0 %v410
    %v614 = vpop.f32.mrb[0].mxu0
    %v615 = vadd.f32 %v530, %v614
    %v616 = vpop.f32.mrb[0].mxu0
    %617 = vdwg.mxu0
    %v618 = vld [vmem:[#allocation3 + $0x2] sm:$0xff]
    %v619 = vld [vmem:[#allocation3 + $0xa] sm:$0xff]
    %v620 = vld [vmem:[#allocation3 + $0x1a] sm:$0xff]
    %v621 = vld [vmem:[#allocation3 + $0x22] sm:$0xff]
    %s622 = scalar_lea.vmem %s3, 256
    %v623 = vld [vmem:[%s622] sm:$0xff]
    %v624 = vld [vmem:[%s622 + $0x8] sm:$0xff]
    %v625 = vld [vmem:[%s622 + $0x10] sm:$0xff]
    %v626 = vld [vmem:[%s622 + $0x18] sm:$0xff]
    %v627 = vld [vmem:[%s622 + $0x20] sm:$0xff]
    %v628 = vld [vmem:[%s622 + $0x28] sm:$0xff]
    %v629 = vld [vmem:[%s622 + $0x30] sm:$0xff]
    %v630 = vld [vmem:[%s622 + $0x38] sm:$0xff]
    %v631 = vld [vmem:[%s622 + $0x40] sm:$0xff]
    %v632 = vld [vmem:[%s622 + $0x48] sm:$0xff]
    %v633 = vld [vmem:[%s622 + $0x50] sm:$0xff]
    %v634 = vld [vmem:[%s622 + $0x58] sm:$0xff]
    %v635 = vld [vmem:[%s622 + $0x60] sm:$0xff]
    %v636 = vld [vmem:[%s622 + $0x68] sm:$0xff]
    %v637 = vld [vmem:[%s622 + $0x70] sm:$0xff]
    %v638 = vld [vmem:[%s622 + $0x78] sm:$0xff]
    %639 = vmatprep.subr.mxu0 0.0
    %640 = vmatpush1.msra.mxu0 %v623
    %641 = vmatprep.subr.mxu0 0.0
    %642 = vmatpush1.msra.mxu0 %v624
    %643 = vmatprep.subr.mxu0 0.0
    %644 = vmatpush1.msra.mxu0 %v625
    %645 = vmatprep.subr.mxu0 0.0
    %646 = vmatpush1.msra.mxu0 %v626
    %647 = vmatprep.subr.mxu0 0.0
    %648 = vmatpush1.msra.mxu0 %v627
    %649 = vmatprep.subr.mxu0 0.0
    %650 = vmatpush1.msra.mxu0 %v628
    %651 = vmatprep.subr.mxu0 0.0
    %652 = vmatpush1.msra.mxu0 %v629
    %653 = vmatprep.subr.mxu0 0.0
    %654 = vmatpush1.msra.mxu0 %v630
    %655 = vmatprep.subr.mxu0 0.0
    %656 = vmatpush1.msra.mxu0 %v631
    %657 = vmatprep.subr.mxu0 0.0
    %658 = vmatpush1.msra.mxu0 %v632
    %659 = vmatprep.subr.mxu0 0.0
    %660 = vmatpush1.msra.mxu0 %v633
    %661 = vmatprep.subr.mxu0 0.0
    %662 = vmatpush1.msra.mxu0 %v634
    %663 = vmatprep.subr.mxu0 0.0
    %664 = vmatpush1.msra.mxu0 %v635
    %665 = vmatprep.subr.mxu0 0.0
    %666 = vmatpush1.msra.mxu0 %v636
    %667 = vmatprep.subr.mxu0 0.0
    %668 = vmatpush1.msra.mxu0 %v637
    %669 = vmatprep.subr.mxu0 0.0
    %670 = vmatpush1.msra.mxu0 %v638
    %671 = vmatprep.subr.mxu0 0.0
    %672 = vmatpush1.msra.mxu0 0.0
    %673 = vmatprep.subr.mxu0 0.0
    %674 = vmatpush1.msra.mxu0 0.0
    %675 = vmatprep.subr.mxu0 0.0
    %676 = vmatpush1.msra.mxu0 0.0
    %677 = vmatprep.subr.mxu0 0.0
    %678 = vmatpush1.msra.mxu0 0.0
    %679 = vmatprep.subr.mxu0 0.0
    %680 = vmatpush1.msra.mxu0 0.0
    %681 = vmatprep.subr.mxu0 0.0
    %682 = vmatpush1.msra.mxu0 0.0
    %683 = vmatprep.subr.mxu0 0.0
    %684 = vmatpush1.msra.mxu0 0.0
    %685 = vmatprep.subr.mxu0 0.0
    %686 = vmatpush1.msra.mxu0 0.0
    %687 = vmatprep.subr.mxu0 0.0
    %688 = vmatpush1.msra.mxu0 0.0
    %689 = vmatprep.subr.mxu0 0.0
    %690 = vmatpush1.msra.mxu0 0.0
    %691 = vmatprep.subr.mxu0 0.0
    %692 = vmatpush1.msra.mxu0 0.0
    %693 = vmatprep.subr.mxu0 0.0
    %694 = vmatpush1.msra.mxu0 0.0
    %695 = vmatprep.subr.mxu0 0.0
    %696 = vmatpush1.msra.mxu0 0.0
    %697 = vmatprep.subr.mxu0 0.0
    %698 = vmatpush1.msra.mxu0 0.0
    %699 = vmatprep.subr.mxu0 0.0
    %700 = vmatpush1.msra.mxu0 0.0
    %701 = vmatprep.subr.mxu0 0.0
    %702 = vmatpush1.msra.mxu0 0.0
    %703 = vmatprep.mubr.f32.mxu0 0.0
    %704 = vmatmul.mubr.f32.gmra.mrb[0].mxu0 %v618
    %v705 = vpop.f32.mrb[0].mxu0
    %v706 = vadd.f32 0.0, %v705
    %v707 = vpop.f32.mrb[0].mxu0
    %708 = vmatprep.mubr.f32.mxu0 0.0
    %709 = vmatmul.mubr.f32.gmra.mrb[0].mxu0 %v619
    %v710 = vpop.f32.mrb[0].mxu0
    %v711 = vadd.f32 0.0, %v710
    %v712 = vpop.f32.mrb[0].mxu0
    %713 = vmatprep.mubr.f32.mxu0 0.0
    %714 = vmatmul.mubr.f32.gmra.mrb[0].mxu0 %v620
    %v715 = vpop.f32.mrb[0].mxu0
    %v716 = vadd.f32 0.0, %v715
    %v717 = vpop.f32.mrb[0].mxu0
    %718 = vmatprep.mubr.f32.mxu0 0.0
    %719 = vmatmul.mubr.f32.gmra.mrb[0].mxu0 %v621
    %v720 = vpop.f32.mrb[0].mxu0
    %v721 = vadd.f32 0.0, %v720
    %v722 = vpop.f32.mrb[0].mxu0
    %723 = vdwg.mxu0
    %v724 = vadd.f32 %v600, %v706
    %v725 = vadd.f32 %v605, %v711
    %v726 = vadd.f32 %v610, %v716
    %v727 = vadd.f32 %v615, %v721
    %v728 = vld [vmem:[%s4] sm:$0x1]
    %v730 = vlaneseq
    %v731 = vshrl.u32 %v730, 7
    %v732 = vsub.s32 0, %v731
    %v733 = vrot.slane %v728, %v732
    %v735 = vadd.f32 %v724, %v733
    %v736 = vadd.f32 %v725, %v733
    %v737 = vadd.f32 %v726, %v733
    %v738 = vadd.f32 %v727, %v733
    %v739 = vmax.f32 %v735, 0.0
    %v740 = vmax.f32 %v736, 0.0
    %v741 = vmax.f32 %v737, 0.0
    %v742 = vmax.f32 %v738, 0.0
    %747 = vrot.lane.b32.xlu0 %v739, 64
    %v748 = vpop.permute.xlu0 %747
    %749 = vrot.lane.b32.xlu0 %v740, 64
    %v750 = vpop.permute.xlu0 %749
    %751 = vrot.lane.b32.xlu0 %v741, 64
    %v752 = vpop.permute.xlu0 %751
    %753 = vrot.lane.b32.xlu0 %v742, 64
    %v754 = vpop.permute.xlu0 %753
    %v759 = vmax.f32 %v739, %v748
    %v760 = vmax.f32 %v740, %v750
    %v761 = vmax.f32 %v741, %v752
    %v762 = vmax.f32 %v742, %v754
    %v764 = vrot.slane %v759, 1
    %v766 = vmax.f32 %v759, %v764
    %v768 = vrot.slane %v760, 1
    %v770 = vmax.f32 %v760, %v768
    %v772 = vrot.slane %v766, 2
    %773 = vrot.lane.b32.xlu0 %v772, 64
    %v774 = vpop.permute.xlu0 %773
    %v776 = vrot.slane %v766, 4
    %v778 = vrot.slane %v766, 6
    %779 = vrot.lane.b32.xlu0 %v778, 64
    %v780 = vpop.permute.xlu0 %779
    %v783 = vrot.slane %v770, 2
    %784 = vrot.lane.b32.xlu0 %v783, 64
    %v785 = vpop.permute.xlu0 %784
    %v787 = vrot.slane %v770, 4
    %v789 = vrot.slane %v770, 6
    %790 = vrot.lane.b32.xlu0 %v789, 64
    %v791 = vpop.permute.xlu0 %790
    %v793 = vsel %vm37, %v766, %v774
    %v794 = vsel %vm37, %v776, %v780
    %v795 = vsel %vm37, %v770, %v785
    %v796 = vsel %vm37, %v787, %v791
    %v801 = vcombine.low %v793, %v794
    %v802 = vcombine.low %v795, %v796
    %v804 = vunpack.c.l.s4 1966171168
    %v805 = vunpack.c.0.s8 %v804
    %v806 = vlaneseq
    %v807 = vshrl.u32 %v806, 7
    %v808 = vsub.s32 %v805, %v807
    %v809 = vrot.slane %v801, %v808
    %v811 = vunpack.c.l.s4 1966171168
    %v812 = vunpack.c.0.s8 %v811
    %v813 = vlaneseq
    %v814 = vshrl.u32 %v813, 7
    %v815 = vsub.s32 %v812, %v814
    %v816 = vrot.slane %v802, %v815
    %v817 = vcombine.low %v809, %v816
    %v819 = vunpack.c.l.s4 1966171168
    %v820 = vunpack.c.0.s8 %v819
    %v821 = vlaneseq
    %v822 = vshrl.u32 %v821, 7
    %v823 = vsub.s32 %v820, %v822
    %v824 = vrot.slane %v817, %v823
    %v826 = vlaneseq
    %vm827 = vcmp.ge.s32.totalorder %v826, 0
    %vm828 = vcmp.lt.s32.totalorder %v826, 512
    %vm829 = vmand %vm827, %vm828
    %830 = vst.msk [vmem:[#allocation4] ss:$2 sm:$0xf] %vm829, %v824
    %v832 = vrot.slane %v761, 1
    %v834 = vmax.f32 %v761, %v832
    %v836 = vrot.slane %v762, 1
    %v838 = vmax.f32 %v762, %v836
    %v840 = vrot.slane %v834, 2
    %841 = vrot.lane.b32.xlu0 %v840, 64
    %v842 = vpop.permute.xlu0 %841
    %v844 = vrot.slane %v834, 4
    %v846 = vrot.slane %v834, 6
    %847 = vrot.lane.b32.xlu0 %v846, 64
    %v848 = vpop.permute.xlu0 %847
    %v851 = vrot.slane %v838, 2
    %852 = vrot.lane.b32.xlu0 %v851, 64
    %v853 = vpop.permute.xlu0 %852
    %v855 = vrot.slane %v838, 4
    %v857 = vrot.slane %v838, 6
    %858 = vrot.lane.b32.xlu0 %v857, 64
    %v859 = vpop.permute.xlu0 %858
    %v861 = vsel %vm37, %v834, %v842
    %v862 = vsel %vm37, %v844, %v848
    %v863 = vsel %vm37, %v838, %v853
    %v864 = vsel %vm37, %v855, %v859
    %v869 = vcombine.low %v861, %v862
    %v870 = vcombine.low %v863, %v864
    %v872 = vunpack.c.l.s4 1966171168
    %v873 = vunpack.c.0.s8 %v872
    %v874 = vlaneseq
    %v875 = vshrl.u32 %v874, 7
    %v876 = vsub.s32 %v873, %v875
    %v877 = vrot.slane %v869, %v876
    %v879 = vunpack.c.l.s4 1966171168
    %v880 = vunpack.c.0.s8 %v879
    %v881 = vlaneseq
    %v882 = vshrl.u32 %v881, 7
    %v883 = vsub.s32 %v880, %v882
    %v884 = vrot.slane %v870, %v883
    %v885 = vcombine.low %v877, %v884
    %v887 = vunpack.c.l.s4 1966171168
    %v888 = vunpack.c.0.s8 %v887
    %v889 = vlaneseq
    %v890 = vshrl.u32 %v889, 7
    %v891 = vsub.s32 %v888, %v890
    %v892 = vrot.slane %v885, %v891
    %s894 = scalar_lea.vmem [#allocation4], 1
    %895 = vst.msk [vmem:[%s894] ss:$2 sm:$0xf] %vm829, %v892
    %v896 = vld [vmem:[#allocation4] sm:$0xff]
    %v897 = vld [vmem:[%s5] sm:$0xff]
    %v898 = vld [vmem:[%s5 + $0x8] sm:$0xff]
    %v899 = vld [vmem:[%s5 + $0x10] sm:$0xff]
    %v900 = vld [vmem:[%s5 + $0x18] sm:$0xff]
    %v901 = vld [vmem:[%s5 + $0x20] sm:$0xff]
    %v902 = vld [vmem:[%s5 + $0x28] sm:$0xff]
    %v903 = vld [vmem:[%s5 + $0x30] sm:$0xff]
    %v904 = vld [vmem:[%s5 + $0x38] sm:$0xff]
    %v905 = vld [vmem:[%s5 + $0x40] sm:$0xff]
    %v906 = vld [vmem:[%s5 + $0x48] sm:$0xff]
    %v907 = vld [vmem:[%s5 + $0x50] sm:$0xff]
    %v908 = vld [vmem:[%s5 + $0x58] sm:$0xff]
    %v909 = vld [vmem:[%s5 + $0x60] sm:$0xff]
    %v910 = vld [vmem:[%s5 + $0x68] sm:$0xff]
    %v911 = vld [vmem:[%s5 + $0x70] sm:$0xff]
    %v912 = vld [vmem:[%s5 + $0x78] sm:$0xff]
    %v913 = vld [vmem:[%s5 + $0x80] sm:$0xff]
    %v914 = vld [vmem:[%s5 + $0x88] sm:$0xff]
    %v915 = vld [vmem:[%s5 + $0x90] sm:$0xff]
    %v916 = vld [vmem:[%s5 + $0x98] sm:$0xff]
    %v917 = vld [vmem:[%s5 + $0xa0] sm:$0xff]
    %v918 = vld [vmem:[%s5 + $0xa8] sm:$0xff]
    %v919 = vld [vmem:[%s5 + $0xb0] sm:$0xff]
    %v920 = vld [vmem:[%s5 + $0xb8] sm:$0xff]
    %v921 = vld [vmem:[%s5 + $0xc0] sm:$0xff]
    %v922 = vld [vmem:[%s5 + $0xc8] sm:$0xff]
    %v923 = vld [vmem:[%s5 + $0xd0] sm:$0xff]
    %v924 = vld [vmem:[%s5 + $0xd8] sm:$0xff]
    %v925 = vld [vmem:[%s5 + $0xe0] sm:$0xff]
    %v926 = vld [vmem:[%s5 + $0xe8] sm:$0xff]
    %v927 = vld [vmem:[%s5 + $0xf0] sm:$0xff]
    %v928 = vld [vmem:[%s5 + $0xf8] sm:$0xff]
    %v929 = vld [vmem:[%s5 + $0x100] sm:$0xff]
    %v930 = vld [vmem:[%s5 + $0x108] sm:$0xff]
    %v931 = vld [vmem:[%s5 + $0x110] sm:$0xff]
    %v932 = vld [vmem:[%s5 + $0x118] sm:$0xff]
    %v933 = vld [vmem:[%s5 + $0x120] sm:$0xff]
    %v934 = vld [vmem:[%s5 + $0x128] sm:$0xff]
    %v935 = vld [vmem:[%s5 + $0x130] sm:$0xff]
    %v936 = vld [vmem:[%s5 + $0x138] sm:$0xff]
    %v937 = vld [vmem:[%s5 + $0x140] sm:$0xff]
    %v938 = vld [vmem:[%s5 + $0x148] sm:$0xff]
    %v939 = vld [vmem:[%s5 + $0x150] sm:$0xff]
    %v940 = vld [vmem:[%s5 + $0x158] sm:$0xff]
    %v941 = vld [vmem:[%s5 + $0x160] sm:$0xff]
    %v942 = vld [vmem:[%s5 + $0x168] sm:$0xff]
    %v943 = vld [vmem:[%s5 + $0x170] sm:$0xff]
    %v944 = vld [vmem:[%s5 + $0x178] sm:$0xff]
    %v945 = vld [vmem:[%s5 + $0x180] sm:$0xff]
    %v946 = vld [vmem:[%s5 + $0x188] sm:$0xff]
    %v947 = vld [vmem:[%s5 + $0x190] sm:$0xff]
    %v948 = vld [vmem:[%s5 + $0x198] sm:$0xff]
    %v949 = vld [vmem:[%s5 + $0x1a0] sm:$0xff]
    %v950 = vld [vmem:[%s5 + $0x1a8] sm:$0xff]
    %v951 = vld [vmem:[%s5 + $0x1b0] sm:$0xff]
    %v952 = vld [vmem:[%s5 + $0x1b8] sm:$0xff]
    %v953 = vld [vmem:[%s5 + $0x1c0] sm:$0xff]
    %v954 = vld [vmem:[%s5 + $0x1c8] sm:$0xff]
    %v955 = vld [vmem:[%s5 + $0x1d0] sm:$0xff]
    %v956 = vld [vmem:[%s5 + $0x1d8] sm:$0xff]
    %v957 = vld [vmem:[%s5 + $0x1e0] sm:$0xff]
    %v958 = vld [vmem:[%s5 + $0x1e8] sm:$0xff]
    %v959 = vld [vmem:[%s5 + $0x1f0] sm:$0xff]
    %v960 = vld [vmem:[%s5 + $0x1f8] sm:$0xff]
    %v961 = vld [vmem:[%s6] sm:$0x1]
    %v963 = vlaneseq
    %v964 = vshrl.u32 %v963, 7
    %v965 = vsub.s32 0, %v964
    %v966 = vrot.slane %v961, %v965
    %v969 = vcombine.high %v896, %v896
    %v971 = vunpack.c.l.s4 1983009808
    %v972 = vunpack.c.0.s8 %v971
    %v973 = vlaneseq
    %v974 = vshrl.u32 %v973, 7
    %v975 = vsub.s32 %v972, %v974
    %v976 = vrot.slane %v896, %v975
    %v978 = vunpack.c.l.s4 1983009808
    %v979 = vunpack.c.0.s8 %v978
    %v980 = vlaneseq
    %v981 = vshrl.u32 %v980, 7
    %v982 = vsub.s32 %v979, %v981
    %v983 = vrot.slane %v969, %v982
    %v984 = vcombine.high %v976, %v976
    %v985 = vcombine.high %v983, %v983
    %990 = vmatprep.subr.mxu0 0.0
    %991 = vmatpush1.msra.mxu0 %v897
    %992 = vmatprep.subr.mxu0 0.0
    %993 = vmatpush1.msra.mxu0 %v898
    %994 = vmatprep.subr.mxu0 0.0
    %995 = vmatpush1.msra.mxu0 %v899
    %996 = vmatprep.subr.mxu0 0.0
    %997 = vmatpush1.msra.mxu0 %v900
    %998 = vmatprep.subr.mxu0 0.0
    %999 = vmatpush1.msra.mxu0 %v901
    %1000 = vmatprep.subr.mxu0 0.0
    %1001 = vmatpush1.msra.mxu0 %v902
    %1002 = vmatprep.subr.mxu0 0.0
    %1003 = vmatpush1.msra.mxu0 %v903
    %1004 = vmatprep.subr.mxu0 0.0
    %1005 = vmatpush1.msra.mxu0 %v904
    %1006 = vmatprep.subr.mxu0 0.0
    %1007 = vmatpush1.msra.mxu0 %v905
    %1008 = vmatprep.subr.mxu0 0.0
    %1009 = vmatpush1.msra.mxu0 %v906
    %1010 = vmatprep.subr.mxu0 0.0
    %1011 = vmatpush1.msra.mxu0 %v907
    %1012 = vmatprep.subr.mxu0 0.0
    %1013 = vmatpush1.msra.mxu0 %v908
    %1014 = vmatprep.subr.mxu0 0.0
    %1015 = vmatpush1.msra.mxu0 %v909
    %1016 = vmatprep.subr.mxu0 0.0
    %1017 = vmatpush1.msra.mxu0 %v910
    %1018 = vmatprep.subr.mxu0 0.0
    %1019 = vmatpush1.msra.mxu0 %v911
    %1020 = vmatprep.subr.mxu0 0.0
    %1021 = vmatpush1.msra.mxu0 %v912
    %1022 = vmatprep.subr.mxu0 0.0
    %1023 = vmatpush1.msra.mxu0 %v913
    %1024 = vmatprep.subr.mxu0 0.0
    %1025 = vmatpush1.msra.mxu0 %v914
    %1026 = vmatprep.subr.mxu0 0.0
    %1027 = vmatpush1.msra.mxu0 %v915
    %1028 = vmatprep.subr.mxu0 0.0
    %1029 = vmatpush1.msra.mxu0 %v916
    %1030 = vmatprep.subr.mxu0 0.0
    %1031 = vmatpush1.msra.mxu0 %v917
    %1032 = vmatprep.subr.mxu0 0.0
    %1033 = vmatpush1.msra.mxu0 %v918
    %1034 = vmatprep.subr.mxu0 0.0
    %1035 = vmatpush1.msra.mxu0 %v919
    %1036 = vmatprep.subr.mxu0 0.0
    %1037 = vmatpush1.msra.mxu0 %v920
    %1038 = vmatprep.subr.mxu0 0.0
    %1039 = vmatpush1.msra.mxu0 %v921
    %1040 = vmatprep.subr.mxu0 0.0
    %1041 = vmatpush1.msra.mxu0 %v922
    %1042 = vmatprep.subr.mxu0 0.0
    %1043 = vmatpush1.msra.mxu0 %v923
    %1044 = vmatprep.subr.mxu0 0.0
    %1045 = vmatpush1.msra.mxu0 %v924
    %1046 = vmatprep.subr.mxu0 0.0
    %1047 = vmatpush1.msra.mxu0 %v925
    %1048 = vmatprep.subr.mxu0 0.0
    %1049 = vmatpush1.msra.mxu0 %v926
    %1050 = vmatprep.subr.mxu0 0.0
    %1051 = vmatpush1.msra.mxu0 %v927
    %1052 = vmatprep.subr.mxu0 0.0
    %1053 = vmatpush1.msra.mxu0 %v928
    %1054 = vmatprep.mubr.f32.mxu0 %v984
    %1055 = vmatmul.mubr.f32.gmra.mrb[0].mxu0 %v976
    %v1056 = vpop.f32.mrb[0].mxu0
    %v1057 = vadd.f32 %v966, %v1056
    %v1058 = vpop.f32.mrb[0].mxu0
    %1059 = vdwg.mxu0
    %1060 = vmatprep.subr.mxu0 0.0
    %1061 = vmatpush1.msra.mxu0 %v929
    %1062 = vmatprep.subr.mxu0 0.0
    %1063 = vmatpush1.msra.mxu0 %v930
    %1064 = vmatprep.subr.mxu0 0.0
    %1065 = vmatpush1.msra.mxu0 %v931
    %1066 = vmatprep.subr.mxu0 0.0
    %1067 = vmatpush1.msra.mxu0 %v932
    %1068 = vmatprep.subr.mxu0 0.0
    %1069 = vmatpush1.msra.mxu0 %v933
    %1070 = vmatprep.subr.mxu0 0.0
    %1071 = vmatpush1.msra.mxu0 %v934
    %1072 = vmatprep.subr.mxu0 0.0
    %1073 = vmatpush1.msra.mxu0 %v935
    %1074 = vmatprep.subr.mxu0 0.0
    %1075 = vmatpush1.msra.mxu0 %v936
    %1076 = vmatprep.subr.mxu0 0.0
    %1077 = vmatpush1.msra.mxu0 %v937
    %1078 = vmatprep.subr.mxu0 0.0
    %1079 = vmatpush1.msra.mxu0 %v938
    %1080 = vmatprep.subr.mxu0 0.0
    %1081 = vmatpush1.msra.mxu0 %v939
    %1082 = vmatprep.subr.mxu0 0.0
    %1083 = vmatpush1.msra.mxu0 %v940
    %1084 = vmatprep.subr.mxu0 0.0
    %1085 = vmatpush1.msra.mxu0 %v941
    %1086 = vmatprep.subr.mxu0 0.0
    %1087 = vmatpush1.msra.mxu0 %v942
    %1088 = vmatprep.subr.mxu0 0.0
    %1089 = vmatpush1.msra.mxu0 %v943
    %1090 = vmatprep.subr.mxu0 0.0
    %1091 = vmatpush1.msra.mxu0 %v944
    %1092 = vmatprep.subr.mxu0 0.0
    %1093 = vmatpush1.msra.mxu0 %v945
    %1094 = vmatprep.subr.mxu0 0.0
    %1095 = vmatpush1.msra.mxu0 %v946
    %1096 = vmatprep.subr.mxu0 0.0
    %1097 = vmatpush1.msra.mxu0 %v947
    %1098 = vmatprep.subr.mxu0 0.0
    %1099 = vmatpush1.msra.mxu0 %v948
    %1100 = vmatprep.subr.mxu0 0.0
    %1101 = vmatpush1.msra.mxu0 %v949
    %1102 = vmatprep.subr.mxu0 0.0
    %1103 = vmatpush1.msra.mxu0 %v950
    %1104 = vmatprep.subr.mxu0 0.0
    %1105 = vmatpush1.msra.mxu0 %v951
    %1106 = vmatprep.subr.mxu0 0.0
    %1107 = vmatpush1.msra.mxu0 %v952
    %1108 = vmatprep.subr.mxu0 0.0
    %1109 = vmatpush1.msra.mxu0 %v953
    %1110 = vmatprep.subr.mxu0 0.0
    %1111 = vmatpush1.msra.mxu0 %v954
    %1112 = vmatprep.subr.mxu0 0.0
    %1113 = vmatpush1.msra.mxu0 %v955
    %1114 = vmatprep.subr.mxu0 0.0
    %1115 = vmatpush1.msra.mxu0 %v956
    %1116 = vmatprep.subr.mxu0 0.0
    %1117 = vmatpush1.msra.mxu0 %v957
    %1118 = vmatprep.subr.mxu0 0.0
    %1119 = vmatpush1.msra.mxu0 %v958
    %1120 = vmatprep.subr.mxu0 0.0
    %1121 = vmatpush1.msra.mxu0 %v959
    %1122 = vmatprep.subr.mxu0 0.0
    %1123 = vmatpush1.msra.mxu0 %v960
    %1124 = vmatprep.mubr.f32.mxu0 %v985
    %1125 = vmatmul.mubr.f32.gmra.mrb[0].mxu0 %v983
    %v1126 = vpop.f32.mrb[0].mxu0
    %v1127 = vadd.f32 %v1057, %v1126
    %v1128 = vpop.f32.mrb[0].mxu0
    %1129 = vdwg.mxu0
    %v1130 = vmax.f32 %v1127, 0.0
    %v1131 = vld [vmem:[%s7] sm:$0xff]
    %v1132 = vld [vmem:[%s7 + $0x8] sm:$0xff]
    %v1133 = vld [vmem:[%s7 + $0x10] sm:$0xff]
    %v1134 = vld [vmem:[%s7 + $0x18] sm:$0xff]
    %v1135 = vld [vmem:[%s8] sm:$0x1]
    %v1137 = vlaneseq
    %v1138 = vshrl.u32 %v1137, 7
    %v1139 = vsub.s32 0, %v1138
    %v1140 = vrot.slane %v1135, %v1139
    %vm1142 = vcmask 261120
    %v1144 = vsel %vm1142, %v1130, 0
    %1146 = vmatprep.subr.mxu0 0.0
    %1147 = vmatpush1.msra.mxu0 %v1131
    %1148 = vmatprep.subr.mxu0 0.0
    %1149 = vmatpush1.msra.mxu0 %v1132
    %1150 = vmatprep.subr.mxu0 0.0
    %1151 = vmatpush1.msra.mxu0 %v1133
    %1152 = vmatprep.subr.mxu0 0.0
    %1153 = vmatpush1.msra.mxu0 %v1134
    %1154 = vmatprep.subr.mxu0 0.0
    %1155 = vmatpush1.msra.mxu0 0.0
    %1156 = vmatprep.subr.mxu0 0.0
    %1157 = vmatpush1.msra.mxu0 0.0
    %1158 = vmatprep.subr.mxu0 0.0
    %1159 = vmatpush1.msra.mxu0 0.0
    %1160 = vmatprep.subr.mxu0 0.0
    %1161 = vmatpush1.msra.mxu0 0.0
    %1162 = vmatprep.subr.mxu0 0.0
    %1163 = vmatpush1.msra.mxu0 0.0
    %1164 = vmatprep.subr.mxu0 0.0
    %1165 = vmatpush1.msra.mxu0 0.0
    %1166 = vmatprep.subr.mxu0 0.0
    %1167 = vmatpush1.msra.mxu0 0.0
    %1168 = vmatprep.subr.mxu0 0.0
    %1169 = vmatpush1.msra.mxu0 0.0
    %1170 = vmatprep.subr.mxu0 0.0
    %1171 = vmatpush1.msra.mxu0 0.0
    %1172 = vmatprep.subr.mxu0 0.0
    %1173 = vmatpush1.msra.mxu0 0.0
    %1174 = vmatprep.subr.mxu0 0.0
    %1175 = vmatpush1.msra.mxu0 0.0
    %1176 = vmatprep.subr.mxu0 0.0
    %1177 = vmatpush1.msra.mxu0 0.0
    %1178 = vmatprep.subr.mxu0 0.0
    %1179 = vmatpush1.msra.mxu0 0.0
    %1180 = vmatprep.subr.mxu0 0.0
    %1181 = vmatpush1.msra.mxu0 0.0
    %1182 = vmatprep.subr.mxu0 0.0
    %1183 = vmatpush1.msra.mxu0 0.0
    %1184 = vmatprep.subr.mxu0 0.0
    %1185 = vmatpush1.msra.mxu0 0.0
    %1186 = vmatprep.subr.mxu0 0.0
    %1187 = vmatpush1.msra.mxu0 0.0
    %1188 = vmatprep.subr.mxu0 0.0
    %1189 = vmatpush1.msra.mxu0 0.0
    %1190 = vmatprep.subr.mxu0 0.0
    %1191 = vmatpush1.msra.mxu0 0.0
    %1192 = vmatprep.subr.mxu0 0.0
    %1193 = vmatpush1.msra.mxu0 0.0
    %1194 = vmatprep.subr.mxu0 0.0
    %1195 = vmatpush1.msra.mxu0 0.0
    %1196 = vmatprep.subr.mxu0 0.0
    %1197 = vmatpush1.msra.mxu0 0.0
    %1198 = vmatprep.subr.mxu0 0.0
    %1199 = vmatpush1.msra.mxu0 0.0
    %1200 = vmatprep.subr.mxu0 0.0
    %1201 = vmatpush1.msra.mxu0 0.0
    %1202 = vmatprep.subr.mxu0 0.0
    %1203 = vmatpush1.msra.mxu0 0.0
    %1204 = vmatprep.subr.mxu0 0.0
    %1205 = vmatpush1.msra.mxu0 0.0
    %1206 = vmatprep.subr.mxu0 0.0
    %1207 = vmatpush1.msra.mxu0 0.0
    %1208 = vmatprep.subr.mxu0 0.0
    %1209 = vmatpush1.msra.mxu0 0.0
    %1210 = vmatprep.mubr.f32.mxu0 0.0
    %1211 = vmatmul.mubr.f32.gmra.mrb[0].mxu0 %v1144
    %v1212 = vpop.f32.mrb[0].mxu0
    %v1213 = vadd.f32 %v1140, %v1212
    %v1214 = vpop.f32.mrb[0].mxu0
    %1215 = vdwg.mxu0
    %vm1216 = vcmask 74752
    %1217 = vst.msk [vmem:[#allocation5] sm:$0x3] %vm1216, %v1213
    // Predicated region
    $region38: #{tpu_custom_call.1} parent=1 // pred_check
      _
    $region39: #{tpu_custom_call.1} parent=1 // pred_check_branch
      %1219 = sbr.rel (0) target = $region41
    $region40: #{tpu_custom_call.1} parent=1 // pred_region
      %s1221 = ssub.s32 32, 32
      %1222 = vsyncadd [#allocation6], %s1221
      %s1224 = sshll.u32 [#allocation5], 4
      %s1225 = int_to_ptr.vmem [resolvable:$true] %s1224
      %1227 = dma.vmem_to_hbm [thread:$0]  %s1225, 32, %s9, [#allocation6]
    $region41: #{tpu_custom_call.1} parent=1 // pred_fallthru
      _
    // Predicated region
    $region42: #{tpu_custom_call.1} parent=1 // pred_check
      _
    $region43: #{tpu_custom_call.1} parent=1 // pred_check_branch
      %1229 = sbr.rel (0) target = $region45
    $region44: #{tpu_custom_call.1} parent=1 // pred_region
      %1230 = dma.done [#allocation6], 32
    $region45: #{tpu_custom_call.1} parent=1 // pred_fallthru
      _
    %1231 = vsyncpa [#allocation6], 1

</llo_original>
